<compile_context>
chip_gen: v7x
topology: tpu7x:2x2x1
jax: 0.10.0
libtpu: 0.0.40
codegen_flags: <defaults>
</compile_context>

<pallas_src>
import functools

import jax
import jax.numpy as jnp
from jax import lax
from jax.experimental import pallas as pl
from jax.experimental.pallas import tpu as pltpu


# ----------------------------------------------------------------------------
# Fused kernel: all layers, both directions fused, full recurrence in registers.
# Packed gate lane order (per direction-fused layer): [i_f i_b f_f f_b g_f g_b o_f o_b]
# Row layout of x / gx: time-major, row = t*Bp + b.
# ----------------------------------------------------------------------------
def _make_fused_lstm_kernel(*, T, Bp, H, num_layers, num_dirs):
    nd = num_dirs
    HW = nd * H          # fused hidden width (2H when bidirectional)
    GW = nd * 4 * H      # fused gate width (8H = 256 for H=32, nd=2)

    def kernel(*refs):
        x_ref = refs[0]                           # (T*Bp, D)
        w_refs = refs[1:1 + 3 * num_layers]       # per layer: wih_cat, bias, whh_bd
        out_ref = refs[1 + 3 * num_layers]        # (Bp, HW)

        # Hoisted lane constants (computed once, reused by every step/layer).
        lane = lax.broadcasted_iota(jnp.int32, (Bp, GW), 1)
        is_g = (lane >= 2 * HW) & (lane < 3 * HW)            # tanh (g) gate lanes
        post_scale = jnp.where(is_g, 1.0, 0.5).astype(jnp.float32)
        post_bias = jnp.where(is_g, 0.0, 0.5).astype(jnp.float32)
        if nd == 2:
            # Within each 2H-wide gate block, first H lanes are forward dir.
            is_fwd = (lane % (2 * H)) < H

        layer_in = x_ref[...].astype(jnp.bfloat16)           # (T*Bp, d_in)

        for layer in range(num_layers):
            wih_ref = w_refs[3 * layer + 0]                   # (d_in, GW)  bf16
            b_ref = w_refs[3 * layer + 1]                     # (1, GW)     f32
            whh_ref = w_refs[3 * layer + 2]                   # (HW, GW)    bf16

            # Hoisted input projection for all timesteps (off the serial path).
            gx = jnp.dot(layer_in, wih_ref[...],
                         preferred_element_type=jnp.float32) + b_ref[...]
            whh_v = whh_ref[...]                              # block-diag (HW, GW)

            h = jnp.zeros((Bp, HW), jnp.float32)
            c = jnp.zeros((Bp, HW), jnp.float32)
            hs = []
            for s in range(T):                                # static unroll, T small
                # Forward lanes read time t=s, backward lanes read t=T-1-s.
                gsel = gx[s * Bp:(s + 1) * Bp, :]
                if nd == 2:
                    grev = gx[(T - 1 - s) * Bp:(T - s) * Bp, :]
                    gsel = jnp.where(is_fwd, gsel, grev)
                gates = gsel + jnp.dot(h.astype(jnp.bfloat16), whh_v,
                                       preferred_element_type=jnp.float32)
                # Single-tanh activation: sigmoid lanes were pre-scaled by 0.5 at
                # pack time, so sigmoid(x) = 0.5*tanh(0.5x) + 0.5 needs only the
                # affine finish here; g lanes get plain tanh.
                act = jnp.tanh(gates) * post_scale + post_bias
                i_g = act[:, 0 * HW:1 * HW]
                f_g = act[:, 1 * HW:2 * HW]
                g_g = act[:, 2 * HW:3 * HW]
                o_g = act[:, 3 * HW:4 * HW]
                c = f_g * c + i_g * g_g
                h = o_g * jnp.tanh(c)
                hs.append(h)

            if layer < num_layers - 1:
                # hs[s] = [h_fwd(t=s) | h_bwd(t=T-1-s)]; the next layer needs the
                # time-aligned sequence [h_fwd(t) | h_bwd(t)] (PyTorch feature order).
                if nd == 2:
                    fwd_seq = jnp.concatenate([hs[t][:, :H] for t in range(T)], axis=0)
                    bwd_seq = jnp.concatenate([hs[T - 1 - t][:, H:] for t in range(T)],
                                              axis=0)
                    layer_in = jnp.concatenate([fwd_seq, bwd_seq],
                                               axis=1).astype(jnp.bfloat16)
                else:
                    layer_in = jnp.concatenate(hs, axis=0).astype(jnp.bfloat16)
            else:
                # Final fused state IS the module output:
                #   hs[-1][:, :H] = h_fwd(T-1) = out[:, -1, :H]
                #   hs[-1][:, H:] = h_bwd(0)   = out[:,  0, H:]
                out_ref[...] = hs[-1]

    return kernel


# ----------------------------------------------------------------------------
# Wrapper: pad batch to a sublane multiple, one pallas_call, no grid.
# ----------------------------------------------------------------------------
def plain_lstm_forward(x_btd, packed_params, *, hidden_dim, num_layers,
                       bidirectional):
    B, T, D = x_btd.shape
    H = hidden_dim
    nd = 2 if bidirectional else 1
    Bp = max(8, ((B + 7) // 8) * 8)            # full-sublane batch

    # (B,T,D) -> time-major, batch padded, flattened (T*Bp, D). Done in XLA, tiny.
    x_tbd = jnp.transpose(x_btd, (1, 0, 2)).astype(jnp.float32)
    if Bp != B:
        x_tbd = jnp.pad(x_tbd, ((0, 0), (0, Bp - B), (0, 0)))
    x_flat = x_tbd.reshape(T * Bp, D)

    flat_args = [x_flat]
    for (wih_cat, bias, whh_bd) in packed_params:
        flat_args += [wih_cat, bias, whh_bd]
    n_in = len(flat_args)

    kernel = _make_fused_lstm_kernel(T=T, Bp=Bp, H=H,
                                     num_layers=num_layers, num_dirs=nd)

    out_p = pl.pallas_call(
        kernel,
        out_shape=jax.ShapeDtypeStruct((Bp, nd * H), jnp.float32),
        in_specs=[pl.BlockSpec(memory_space=pltpu.MemorySpace.VMEM)] * n_in,
        out_specs=pl.BlockSpec(memory_space=pltpu.MemorySpace.VMEM),
    )(*flat_args)
    return out_p[:B]


# ----------------------------------------------------------------------------
# Parameter init (PyTorch-style uniform(-1/sqrt(H), 1/sqrt(H))).
# ----------------------------------------------------------------------------
def init_params(key, *, input_dim, hidden_dim, num_layers, bidirectional):
    num_dirs = 2 if bidirectional else 1
    k = 1.0 / jnp.sqrt(jnp.float32(hidden_dim))
    params = {}
    for layer in range(num_layers):
        d_in = input_dim if layer == 0 else hidden_dim * num_dirs
        for d in range(num_dirs):
            key, k1, k2, k3, k4 = jax.random.split(key, 5)
            w_ih = jax.random.uniform(k1, (4 * hidden_dim, d_in), jnp.float32, -k, k)
            w_hh = jax.random.uniform(k2, (4 * hidden_dim, hidden_dim), jnp.float32, -k, k)
            b_ih = jax.random.uniform(k3, (4 * hidden_dim,), jnp.float32, -k, k)
            b_hh = jax.random.uniform(k4, (4 * hidden_dim,), jnp.float32, -k, k)
            params[(layer, d)] = (
                w_ih.T,                       # (d_in, 4H)
                w_hh.T,                       # (H, 4H)
                (b_ih + b_hh)[None, :],       # (1, 4H)
            )
    return params


# ----------------------------------------------------------------------------
# Packing: interleave both directions' gates per gate block, build block-diag
# W_hh, and pre-scale sigmoid-gate (i, f, o) columns by 0.5 (exact power of two)
# for the single-tanh activation.  Matmul weights cast to bf16; bias stays f32.
# ----------------------------------------------------------------------------
def pack_params(params, *, hidden_dim, num_layers, bidirectional):
    H = hidden_dim
    nd = 2 if bidirectional else 1
    GW = nd * 4 * H
    gate_scale = (0.5, 0.5, 1.0, 0.5)          # i, f, g, o
    packed = []
    for layer in range(num_layers):
        d_in = params[(layer, 0)][0].shape[0]
        wih = jnp.zeros((d_in, GW), jnp.float32)
        bias = jnp.zeros((1, GW), jnp.float32)
        whh = jnp.zeros((nd * H, GW), jnp.float32)
        for d in range(nd):
            w_ih_t, w_hh_t, b = params[(layer, d)]
            for q in range(4):
                col = q * nd * H + d * H
                s = gate_scale[q]
                wih = wih.at[:, col:col + H].set(s * w_ih_t[:, q * H:(q + 1) * H])
                bias = bias.at[:, col:col + H].set(s * b[:, q * H:(q + 1) * H])
                whh = whh.at[d * H:(d + 1) * H, col:col + H].set(
                    s * w_hh_t[:, q * H:(q + 1) * H])
        packed.append((wih.astype(jnp.bfloat16), bias, whh.astype(jnp.bfloat16)))
    return packed


# ----------------------------------------------------------------------------
# Pure-JAX reference (lax.scan, f32) for correctness checking.
# ----------------------------------------------------------------------------
def _ref_layer_dir(x_tbd, w_ih_t, w_hh_t, bias, reverse):
    T, B, D = x_tbd.shape
    H = w_hh_t.shape[0]
    xs = x_tbd[::-1] if reverse else x_tbd

    def step(carry, x_t):
        h, c = carry
        g = x_t @ w_ih_t + h @ w_hh_t + bias
        i = jax.nn.sigmoid(g[:, :H])
        f = jax.nn.sigmoid(g[:, H:2 * H])
        gg = jnp.tanh(g[:, 2 * H:3 * H])
        o = jax.nn.sigmoid(g[:, 3 * H:4 * H])
        c = f * c + i * gg
        h = o * jnp.tanh(c)
        return (h, c), h

    zero = jnp.zeros((B, H), jnp.float32)
    _, ys = lax.scan(step, (zero, zero), xs)
    return ys[::-1] if reverse else ys


def _ref_forward(x_btd, params, *, hidden_dim, num_layers, bidirectional):
    x_tbd = jnp.transpose(x_btd, (1, 0, 2)).astype(jnp.float32)
    num_dirs = 2 if bidirectional else 1
    layer_in = x_tbd
    y_fwd = y_bwd = None
    for layer in range(num_layers):
        outs = []
        for d in range(num_dirs):
            w_ih_t, w_hh_t, bias = params[(layer, d)]
            outs.append(_ref_layer_dir(layer_in, w_ih_t, w_hh_t, bias, d == 1))
        y_fwd, y_bwd = outs[0], (outs[1] if bidirectional else None)
        layer_in = jnp.concatenate(outs, -1) if bidirectional else outs[0]
    out = y_fwd[-1]
    if bidirectional:
        out = jnp.concatenate([out, y_bwd[0]], axis=1)
    return out


if __name__ == "__main__":
    HIDDEN_DIM = 32
    NUM_LAYERS = 2
    BIDIRECTIONAL = True

    B, T, D = 2, 8, 16   # batch, sequence length, input_dim

    key = jax.random.PRNGKey(0)
    kx, kp = jax.random.split(key)
    x = jax.random.normal(kx, (B, T, D), jnp.float32)
    params = init_params(kp, input_dim=D, hidden_dim=HIDDEN_DIM,
                         num_layers=NUM_LAYERS, bidirectional=BIDIRECTIONAL)
    packed = pack_params(params, hidden_dim=HIDDEN_DIM, num_layers=NUM_LAYERS,
                         bidirectional=BIDIRECTIONAL)

    fwd = functools.partial(plain_lstm_forward, hidden_dim=HIDDEN_DIM,
                            num_layers=NUM_LAYERS, bidirectional=BIDIRECTIONAL)
    out = jax.jit(lambda xx: fwd(xx, packed))(x)
    out = jax.block_until_ready(out)

    ref = _ref_forward(x, params, hidden_dim=HIDDEN_DIM,
                       num_layers=NUM_LAYERS, bidirectional=BIDIRECTIONAL)
    ref = jax.block_until_ready(ref)

    assert out.shape == (B, 2 * HIDDEN_DIM), out.shape
    max_err = float(jnp.max(jnp.abs(out - ref)))
    assert jnp.allclose(out, ref, rtol=2e-3, atol=2e-3), \
        f"mismatch vs reference (max abs err {max_err})"
    print("KERNEL_OK")
</pallas_src>

<mosaic_0001>
module attributes {stable_mosaic.version = 11 : i64} {
  func.func @kernel(%arg0: memref<64x16xf32, #tpu.memory_space<vmem>>, %arg1: memref<16x256xbf16, #tpu.memory_space<vmem>>, %arg2: memref<1x256xf32, #tpu.memory_space<vmem>>, %arg3: memref<64x256xbf16, #tpu.memory_space<vmem>>, %arg4: memref<64x256xbf16, #tpu.memory_space<vmem>>, %arg5: memref<1x256xf32, #tpu.memory_space<vmem>>, %arg6: memref<64x256xbf16, #tpu.memory_space<vmem>>, %arg7: memref<8x64xf32, #tpu.memory_space<vmem>>) attributes {dimension_semantics = [], scalar_prefetch = 0 : i64, scratch_operands = 0 : i64, tpu.core_type = #tpu.core_type<tc>} {
    %0 = tpu.iota {dimensions = array<i32: 1>} : vector<8x256xi32>
    %c128_i32 = arith.constant 128 : i32
    %1 = vector.broadcast %c128_i32 : i32 to vector<8x256xi32>
    %2 = arith.cmpi sge, %0, %1 : vector<8x256xi32>
    %c192_i32 = arith.constant 192 : i32
    %3 = vector.broadcast %c192_i32 : i32 to vector<8x256xi32>
    %4 = arith.cmpi slt, %0, %3 : vector<8x256xi32>
    %5 = arith.andi %2, %4 : vector<8x256xi1>
    %cst = arith.constant 1.000000e+00 : f32
    %cst_0 = arith.constant 5.000000e-01 : f32
    %6 = vector.broadcast %cst : f32 to vector<8x256xf32>
    %7 = vector.broadcast %cst_0 : f32 to vector<8x256xf32>
    %8 = arith.select %5, %6, %7 : vector<8x256xi1>, vector<8x256xf32>
    %cst_1 = arith.constant 0.000000e+00 : f32
    %cst_2 = arith.constant 5.000000e-01 : f32
    %9 = vector.broadcast %cst_1 : f32 to vector<8x256xf32>
    %10 = vector.broadcast %cst_2 : f32 to vector<8x256xf32>
    %11 = arith.select %5, %9, %10 : vector<8x256xi1>, vector<8x256xf32>
    %c64_i32 = arith.constant 64 : i32
    %c0_i32 = arith.constant 0 : i32
    %12 = arith.cmpi eq, %c64_i32, %c0_i32 : i32
    %c1_i32 = arith.constant 1 : i32
    %13 = arith.select %12, %c1_i32, %c64_i32 : i32
    %14 = vector.broadcast %13 : i32 to vector<8x256xi32>
    %15 = arith.remsi %0, %14 : vector<8x256xi32>
    %c0_i32_3 = arith.constant 0 : i32
    %16 = vector.broadcast %c0_i32_3 : i32 to vector<8x256xi32>
    %17 = arith.cmpi ne, %15, %16 : vector<8x256xi32>
    %c0_i32_4 = arith.constant 0 : i32
    %18 = vector.broadcast %c0_i32_4 : i32 to vector<8x256xi32>
    %19 = arith.cmpi slt, %15, %18 : vector<8x256xi32>
    %c0_i32_5 = arith.constant 0 : i32
    %20 = arith.cmpi slt, %13, %c0_i32_5 : i32
    %21 = vector.broadcast %20 : i1 to vector<8x256xi1>
    %22 = vector.broadcast %21 : vector<8x256xi1> to vector<8x256xi1>
    %23 = arith.xori %19, %22 : vector<8x256xi1>
    %24 = arith.andi %23, %17 : vector<8x256xi1>
    %25 = vector.broadcast %13 : i32 to vector<8x256xi32>
    %26 = arith.addi %15, %25 : vector<8x256xi32>
    %27 = arith.select %24, %26, %15 : vector<8x256xi1>, vector<8x256xi32>
    %c32_i32 = arith.constant 32 : i32
    %28 = vector.broadcast %c32_i32 : i32 to vector<8x256xi32>
    %29 = arith.cmpi slt, %27, %28 : vector<8x256xi32>
    %c0 = arith.constant 0 : index
    %c0_6 = arith.constant 0 : index
    %30 = vector.load %arg0[%c0, %c0_6] : memref<64x16xf32, #tpu.memory_space<vmem>>, vector<64x16xf32>
    %31 = arith.truncf %30 : vector<64x16xf32> to vector<64x16xbf16>
    %c0_7 = arith.constant 0 : index
    %c0_8 = arith.constant 0 : index
    %32 = vector.load %arg1[%c0_7, %c0_8] : memref<16x256xbf16, #tpu.memory_space<vmem>>, vector<16x256xbf16>
    %cst_9 = arith.constant dense<0.000000e+00> : vector<64x256xf32>
    %33 = tpu.matmul %31, %32, %cst_9 {dimension_numbers = #tpu.dot_dimension_numbers<[1], [0], [0], [1], [0, 0, 1, 1], [], []>} : vector<64x16xbf16>, vector<16x256xbf16>, vector<64x256xf32> -> vector<64x256xf32>
    %c0_10 = arith.constant 0 : index
    %c0_11 = arith.constant 0 : index
    %34 = vector.load %arg2[%c0_10, %c0_11] : memref<1x256xf32, #tpu.memory_space<vmem>>, vector<1x256xf32>
    %35 = vector.broadcast %34 : vector<1x256xf32> to vector<64x256xf32>
    %36 = arith.addf %33, %35 : vector<64x256xf32>
    %c0_12 = arith.constant 0 : index
    %c0_13 = arith.constant 0 : index
    %37 = vector.load %arg3[%c0_12, %c0_13] : memref<64x256xbf16, #tpu.memory_space<vmem>>, vector<64x256xbf16>
    %cst_14 = arith.constant 0.000000e+00 : f32
    %38 = vector.broadcast %cst_14 : f32 to vector<8x64xf32>
    %cst_15 = arith.constant 0.000000e+00 : f32
    %39 = vector.broadcast %cst_15 : f32 to vector<8x64xf32>
    %40 = vector.extract_strided_slice %36 {offsets = [0, 0], sizes = [8, 256], strides = [1, 1]} : vector<64x256xf32> to vector<8x256xf32>
    %41 = vector.extract_strided_slice %36 {offsets = [56, 0], sizes = [8, 256], strides = [1, 1]} : vector<64x256xf32> to vector<8x256xf32>
    %42 = arith.select %29, %40, %41 : vector<8x256xi1>, vector<8x256xf32>
    %43 = arith.truncf %38 : vector<8x64xf32> to vector<8x64xbf16>
    %cst_16 = arith.constant dense<0.000000e+00> : vector<8x256xf32>
    %44 = tpu.matmul %43, %37, %cst_16 {dimension_numbers = #tpu.dot_dimension_numbers<[1], [0], [0], [1], [0, 0, 1, 1], [], []>} : vector<8x64xbf16>, vector<64x256xbf16>, vector<8x256xf32> -> vector<8x256xf32>
    %45 = arith.addf %42, %44 : vector<8x256xf32>
    %46 = math.tanh %45 : vector<8x256xf32>
    %47 = arith.mulf %46, %8 : vector<8x256xf32>
    %48 = arith.addf %47, %11 : vector<8x256xf32>
    %49 = vector.extract_strided_slice %48 {offsets = [0, 0], sizes = [8, 64], strides = [1, 1]} : vector<8x256xf32> to vector<8x64xf32>
    %50 = vector.extract_strided_slice %48 {offsets = [0, 64], sizes = [8, 64], strides = [1, 1]} : vector<8x256xf32> to vector<8x64xf32>
    %51 = vector.extract_strided_slice %48 {offsets = [0, 128], sizes = [8, 64], strides = [1, 1]} : vector<8x256xf32> to vector<8x64xf32>
    %52 = vector.extract_strided_slice %48 {offsets = [0, 192], sizes = [8, 64], strides = [1, 1]} : vector<8x256xf32> to vector<8x64xf32>
    %53 = arith.mulf %50, %39 : vector<8x64xf32>
    %54 = arith.mulf %49, %51 : vector<8x64xf32>
    %55 = arith.addf %53, %54 : vector<8x64xf32>
    %56 = math.tanh %55 : vector<8x64xf32>
    %57 = arith.mulf %52, %56 : vector<8x64xf32>
    %58 = vector.extract_strided_slice %36 {offsets = [8, 0], sizes = [8, 256], strides = [1, 1]} : vector<64x256xf32> to vector<8x256xf32>
    %59 = vector.extract_strided_slice %36 {offsets = [48, 0], sizes = [8, 256], strides = [1, 1]} : vector<64x256xf32> to vector<8x256xf32>
    %60 = arith.select %29, %58, %59 : vector<8x256xi1>, vector<8x256xf32>
    %61 = arith.truncf %57 : vector<8x64xf32> to vector<8x64xbf16>
    %cst_17 = arith.constant dense<0.000000e+00> : vector<8x256xf32>
    %62 = tpu.matmul %61, %37, %cst_17 {dimension_numbers = #tpu.dot_dimension_numbers<[1], [0], [0], [1], [0, 0, 1, 1], [], []>} : vector<8x64xbf16>, vector<64x256xbf16>, vector<8x256xf32> -> vector<8x256xf32>
    %63 = arith.addf %60, %62 : vector<8x256xf32>
    %64 = math.tanh %63 : vector<8x256xf32>
    %65 = arith.mulf %64, %8 : vector<8x256xf32>
    %66 = arith.addf %65, %11 : vector<8x256xf32>
    %67 = vector.extract_strided_slice %66 {offsets = [0, 0], sizes = [8, 64], strides = [1, 1]} : vector<8x256xf32> to vector<8x64xf32>
    %68 = vector.extract_strided_slice %66 {offsets = [0, 64], sizes = [8, 64], strides = [1, 1]} : vector<8x256xf32> to vector<8x64xf32>
    %69 = vector.extract_strided_slice %66 {offsets = [0, 128], sizes = [8, 64], strides = [1, 1]} : vector<8x256xf32> to vector<8x64xf32>
    %70 = vector.extract_strided_slice %66 {offsets = [0, 192], sizes = [8, 64], strides = [1, 1]} : vector<8x256xf32> to vector<8x64xf32>
    %71 = arith.mulf %68, %55 : vector<8x64xf32>
    %72 = arith.mulf %67, %69 : vector<8x64xf32>
    %73 = arith.addf %71, %72 : vector<8x64xf32>
    %74 = math.tanh %73 : vector<8x64xf32>
    %75 = arith.mulf %70, %74 : vector<8x64xf32>
    %76 = vector.extract_strided_slice %36 {offsets = [16, 0], sizes = [8, 256], strides = [1, 1]} : vector<64x256xf32> to vector<8x256xf32>
    %77 = vector.extract_strided_slice %36 {offsets = [40, 0], sizes = [8, 256], strides = [1, 1]} : vector<64x256xf32> to vector<8x256xf32>
    %78 = arith.select %29, %76, %77 : vector<8x256xi1>, vector<8x256xf32>
    %79 = arith.truncf %75 : vector<8x64xf32> to vector<8x64xbf16>
    %cst_18 = arith.constant dense<0.000000e+00> : vector<8x256xf32>
    %80 = tpu.matmul %79, %37, %cst_18 {dimension_numbers = #tpu.dot_dimension_numbers<[1], [0], [0], [1], [0, 0, 1, 1], [], []>} : vector<8x64xbf16>, vector<64x256xbf16>, vector<8x256xf32> -> vector<8x256xf32>
    %81 = arith.addf %78, %80 : vector<8x256xf32>
    %82 = math.tanh %81 : vector<8x256xf32>
    %83 = arith.mulf %82, %8 : vector<8x256xf32>
    %84 = arith.addf %83, %11 : vector<8x256xf32>
    %85 = vector.extract_strided_slice %84 {offsets = [0, 0], sizes = [8, 64], strides = [1, 1]} : vector<8x256xf32> to vector<8x64xf32>
    %86 = vector.extract_strided_slice %84 {offsets = [0, 64], sizes = [8, 64], strides = [1, 1]} : vector<8x256xf32> to vector<8x64xf32>
    %87 = vector.extract_strided_slice %84 {offsets = [0, 128], sizes = [8, 64], strides = [1, 1]} : vector<8x256xf32> to vector<8x64xf32>
    %88 = vector.extract_strided_slice %84 {offsets = [0, 192], sizes = [8, 64], strides = [1, 1]} : vector<8x256xf32> to vector<8x64xf32>
    %89 = arith.mulf %86, %73 : vector<8x64xf32>
    %90 = arith.mulf %85, %87 : vector<8x64xf32>
    %91 = arith.addf %89, %90 : vector<8x64xf32>
    %92 = math.tanh %91 : vector<8x64xf32>
    %93 = arith.mulf %88, %92 : vector<8x64xf32>
    %94 = vector.extract_strided_slice %36 {offsets = [24, 0], sizes = [8, 256], strides = [1, 1]} : vector<64x256xf32> to vector<8x256xf32>
    %95 = vector.extract_strided_slice %36 {offsets = [32, 0], sizes = [8, 256], strides = [1, 1]} : vector<64x256xf32> to vector<8x256xf32>
    %96 = arith.select %29, %94, %95 : vector<8x256xi1>, vector<8x256xf32>
    %97 = arith.truncf %93 : vector<8x64xf32> to vector<8x64xbf16>
    %cst_19 = arith.constant dense<0.000000e+00> : vector<8x256xf32>
    %98 = tpu.matmul %97, %37, %cst_19 {dimension_numbers = #tpu.dot_dimension_numbers<[1], [0], [0], [1], [0, 0, 1, 1], [], []>} : vector<8x64xbf16>, vector<64x256xbf16>, vector<8x256xf32> -> vector<8x256xf32>
    %99 = arith.addf %96, %98 : vector<8x256xf32>
    %100 = math.tanh %99 : vector<8x256xf32>
    %101 = arith.mulf %100, %8 : vector<8x256xf32>
    %102 = arith.addf %101, %11 : vector<8x256xf32>
    %103 = vector.extract_strided_slice %102 {offsets = [0, 0], sizes = [8, 64], strides = [1, 1]} : vector<8x256xf32> to vector<8x64xf32>
    %104 = vector.extract_strided_slice %102 {offsets = [0, 64], sizes = [8, 64], strides = [1, 1]} : vector<8x256xf32> to vector<8x64xf32>
    %105 = vector.extract_strided_slice %102 {offsets = [0, 128], sizes = [8, 64], strides = [1, 1]} : vector<8x256xf32> to vector<8x64xf32>
    %106 = vector.extract_strided_slice %102 {offsets = [0, 192], sizes = [8, 64], strides = [1, 1]} : vector<8x256xf32> to vector<8x64xf32>
    %107 = arith.mulf %104, %91 : vector<8x64xf32>
    %108 = arith.mulf %103, %105 : vector<8x64xf32>
    %109 = arith.addf %107, %108 : vector<8x64xf32>
    %110 = math.tanh %109 : vector<8x64xf32>
    %111 = arith.mulf %106, %110 : vector<8x64xf32>
    %112 = vector.extract_strided_slice %36 {offsets = [32, 0], sizes = [8, 256], strides = [1, 1]} : vector<64x256xf32> to vector<8x256xf32>
    %113 = vector.extract_strided_slice %36 {offsets = [24, 0], sizes = [8, 256], strides = [1, 1]} : vector<64x256xf32> to vector<8x256xf32>
    %114 = arith.select %29, %112, %113 : vector<8x256xi1>, vector<8x256xf32>
    %115 = arith.truncf %111 : vector<8x64xf32> to vector<8x64xbf16>
    %cst_20 = arith.constant dense<0.000000e+00> : vector<8x256xf32>
    %116 = tpu.matmul %115, %37, %cst_20 {dimension_numbers = #tpu.dot_dimension_numbers<[1], [0], [0], [1], [0, 0, 1, 1], [], []>} : vector<8x64xbf16>, vector<64x256xbf16>, vector<8x256xf32> -> vector<8x256xf32>
    %117 = arith.addf %114, %116 : vector<8x256xf32>
    %118 = math.tanh %117 : vector<8x256xf32>
    %119 = arith.mulf %118, %8 : vector<8x256xf32>
    %120 = arith.addf %119, %11 : vector<8x256xf32>
    %121 = vector.extract_strided_slice %120 {offsets = [0, 0], sizes = [8, 64], strides = [1, 1]} : vector<8x256xf32> to vector<8x64xf32>
    %122 = vector.extract_strided_slice %120 {offsets = [0, 64], sizes = [8, 64], strides = [1, 1]} : vector<8x256xf32> to vector<8x64xf32>
    %123 = vector.extract_strided_slice %120 {offsets = [0, 128], sizes = [8, 64], strides = [1, 1]} : vector<8x256xf32> to vector<8x64xf32>
    %124 = vector.extract_strided_slice %120 {offsets = [0, 192], sizes = [8, 64], strides = [1, 1]} : vector<8x256xf32> to vector<8x64xf32>
    %125 = arith.mulf %122, %109 : vector<8x64xf32>
    %126 = arith.mulf %121, %123 : vector<8x64xf32>
    %127 = arith.addf %125, %126 : vector<8x64xf32>
    %128 = math.tanh %127 : vector<8x64xf32>
    %129 = arith.mulf %124, %128 : vector<8x64xf32>
    %130 = vector.extract_strided_slice %36 {offsets = [40, 0], sizes = [8, 256], strides = [1, 1]} : vector<64x256xf32> to vector<8x256xf32>
    %131 = vector.extract_strided_slice %36 {offsets = [16, 0], sizes = [8, 256], strides = [1, 1]} : vector<64x256xf32> to vector<8x256xf32>
    %132 = arith.select %29, %130, %131 : vector<8x256xi1>, vector<8x256xf32>
    %133 = arith.truncf %129 : vector<8x64xf32> to vector<8x64xbf16>
    %cst_21 = arith.constant dense<0.000000e+00> : vector<8x256xf32>
    %134 = tpu.matmul %133, %37, %cst_21 {dimension_numbers = #tpu.dot_dimension_numbers<[1], [0], [0], [1], [0, 0, 1, 1], [], []>} : vector<8x64xbf16>, vector<64x256xbf16>, vector<8x256xf32> -> vector<8x256xf32>
    %135 = arith.addf %132, %134 : vector<8x256xf32>
    %136 = math.tanh %135 : vector<8x256xf32>
    %137 = arith.mulf %136, %8 : vector<8x256xf32>
    %138 = arith.addf %137, %11 : vector<8x256xf32>
    %139 = vector.extract_strided_slice %138 {offsets = [0, 0], sizes = [8, 64], strides = [1, 1]} : vector<8x256xf32> to vector<8x64xf32>
    %140 = vector.extract_strided_slice %138 {offsets = [0, 64], sizes = [8, 64], strides = [1, 1]} : vector<8x256xf32> to vector<8x64xf32>
    %141 = vector.extract_strided_slice %138 {offsets = [0, 128], sizes = [8, 64], strides = [1, 1]} : vector<8x256xf32> to vector<8x64xf32>
    %142 = vector.extract_strided_slice %138 {offsets = [0, 192], sizes = [8, 64], strides = [1, 1]} : vector<8x256xf32> to vector<8x64xf32>
    %143 = arith.mulf %140, %127 : vector<8x64xf32>
    %144 = arith.mulf %139, %141 : vector<8x64xf32>
    %145 = arith.addf %143, %144 : vector<8x64xf32>
    %146 = math.tanh %145 : vector<8x64xf32>
    %147 = arith.mulf %142, %146 : vector<8x64xf32>
    %148 = vector.extract_strided_slice %36 {offsets = [48, 0], sizes = [8, 256], strides = [1, 1]} : vector<64x256xf32> to vector<8x256xf32>
    %149 = vector.extract_strided_slice %36 {offsets = [8, 0], sizes = [8, 256], strides = [1, 1]} : vector<64x256xf32> to vector<8x256xf32>
    %150 = arith.select %29, %148, %149 : vector<8x256xi1>, vector<8x256xf32>
    %151 = arith.truncf %147 : vector<8x64xf32> to vector<8x64xbf16>
    %cst_22 = arith.constant dense<0.000000e+00> : vector<8x256xf32>
    %152 = tpu.matmul %151, %37, %cst_22 {dimension_numbers = #tpu.dot_dimension_numbers<[1], [0], [0], [1], [0, 0, 1, 1], [], []>} : vector<8x64xbf16>, vector<64x256xbf16>, vector<8x256xf32> -> vector<8x256xf32>
    %153 = arith.addf %150, %152 : vector<8x256xf32>
    %154 = math.tanh %153 : vector<8x256xf32>
    %155 = arith.mulf %154, %8 : vector<8x256xf32>
    %156 = arith.addf %155, %11 : vector<8x256xf32>
    %157 = vector.extract_strided_slice %156 {offsets = [0, 0], sizes = [8, 64], strides = [1, 1]} : vector<8x256xf32> to vector<8x64xf32>
    %158 = vector.extract_strided_slice %156 {offsets = [0, 64], sizes = [8, 64], strides = [1, 1]} : vector<8x256xf32> to vector<8x64xf32>
    %159 = vector.extract_strided_slice %156 {offsets = [0, 128], sizes = [8, 64], strides = [1, 1]} : vector<8x256xf32> to vector<8x64xf32>
    %160 = vector.extract_strided_slice %156 {offsets = [0, 192], sizes = [8, 64], strides = [1, 1]} : vector<8x256xf32> to vector<8x64xf32>
    %161 = arith.mulf %158, %145 : vector<8x64xf32>
    %162 = arith.mulf %157, %159 : vector<8x64xf32>
    %163 = arith.addf %161, %162 : vector<8x64xf32>
    %164 = math.tanh %163 : vector<8x64xf32>
    %165 = arith.mulf %160, %164 : vector<8x64xf32>
    %166 = vector.extract_strided_slice %36 {offsets = [56, 0], sizes = [8, 256], strides = [1, 1]} : vector<64x256xf32> to vector<8x256xf32>
    %167 = vector.extract_strided_slice %36 {offsets = [0, 0], sizes = [8, 256], strides = [1, 1]} : vector<64x256xf32> to vector<8x256xf32>
    %168 = arith.select %29, %166, %167 : vector<8x256xi1>, vector<8x256xf32>
    %169 = arith.truncf %165 : vector<8x64xf32> to vector<8x64xbf16>
    %cst_23 = arith.constant dense<0.000000e+00> : vector<8x256xf32>
    %170 = tpu.matmul %169, %37, %cst_23 {dimension_numbers = #tpu.dot_dimension_numbers<[1], [0], [0], [1], [0, 0, 1, 1], [], []>} : vector<8x64xbf16>, vector<64x256xbf16>, vector<8x256xf32> -> vector<8x256xf32>
    %171 = arith.addf %168, %170 : vector<8x256xf32>
    %172 = math.tanh %171 : vector<8x256xf32>
    %173 = arith.mulf %172, %8 : vector<8x256xf32>
    %174 = arith.addf %173, %11 : vector<8x256xf32>
    %175 = vector.extract_strided_slice %174 {offsets = [0, 0], sizes = [8, 64], strides = [1, 1]} : vector<8x256xf32> to vector<8x64xf32>
    %176 = vector.extract_strided_slice %174 {offsets = [0, 64], sizes = [8, 64], strides = [1, 1]} : vector<8x256xf32> to vector<8x64xf32>
    %177 = vector.extract_strided_slice %174 {offsets = [0, 128], sizes = [8, 64], strides = [1, 1]} : vector<8x256xf32> to vector<8x64xf32>
    %178 = vector.extract_strided_slice %174 {offsets = [0, 192], sizes = [8, 64], strides = [1, 1]} : vector<8x256xf32> to vector<8x64xf32>
    %179 = arith.mulf %176, %163 : vector<8x64xf32>
    %180 = arith.mulf %175, %177 : vector<8x64xf32>
    %181 = arith.addf %179, %180 : vector<8x64xf32>
    %182 = math.tanh %181 : vector<8x64xf32>
    %183 = arith.mulf %178, %182 : vector<8x64xf32>
    %184 = vector.extract_strided_slice %57 {offsets = [0, 0], sizes = [8, 32], strides = [1, 1]} : vector<8x64xf32> to vector<8x32xf32>
    %185 = vector.extract_strided_slice %75 {offsets = [0, 0], sizes = [8, 32], strides = [1, 1]} : vector<8x64xf32> to vector<8x32xf32>
    %186 = vector.extract_strided_slice %93 {offsets = [0, 0], sizes = [8, 32], strides = [1, 1]} : vector<8x64xf32> to vector<8x32xf32>
    %187 = vector.extract_strided_slice %111 {offsets = [0, 0], sizes = [8, 32], strides = [1, 1]} : vector<8x64xf32> to vector<8x32xf32>
    %188 = vector.extract_strided_slice %129 {offsets = [0, 0], sizes = [8, 32], strides = [1, 1]} : vector<8x64xf32> to vector<8x32xf32>
    %189 = vector.extract_strided_slice %147 {offsets = [0, 0], sizes = [8, 32], strides = [1, 1]} : vector<8x64xf32> to vector<8x32xf32>
    %190 = vector.extract_strided_slice %165 {offsets = [0, 0], sizes = [8, 32], strides = [1, 1]} : vector<8x64xf32> to vector<8x32xf32>
    %191 = vector.extract_strided_slice %183 {offsets = [0, 0], sizes = [8, 32], strides = [1, 1]} : vector<8x64xf32> to vector<8x32xf32>
    %192 = tpu.concatenate %184, %185, %186, %187, %188, %189, %190, %191 in 0 : vector<8x32xf32>, vector<8x32xf32>, vector<8x32xf32>, vector<8x32xf32>, vector<8x32xf32>, vector<8x32xf32>, vector<8x32xf32>, vector<8x32xf32> -> vector<64x32xf32>
    %193 = vector.extract_strided_slice %183 {offsets = [0, 32], sizes = [8, 32], strides = [1, 1]} : vector<8x64xf32> to vector<8x32xf32>
    %194 = vector.extract_strided_slice %165 {offsets = [0, 32], sizes = [8, 32], strides = [1, 1]} : vector<8x64xf32> to vector<8x32xf32>
    %195 = vector.extract_strided_slice %147 {offsets = [0, 32], sizes = [8, 32], strides = [1, 1]} : vector<8x64xf32> to vector<8x32xf32>
    %196 = vector.extract_strided_slice %129 {offsets = [0, 32], sizes = [8, 32], strides = [1, 1]} : vector<8x64xf32> to vector<8x32xf32>
    %197 = vector.extract_strided_slice %111 {offsets = [0, 32], sizes = [8, 32], strides = [1, 1]} : vector<8x64xf32> to vector<8x32xf32>
    %198 = vector.extract_strided_slice %93 {offsets = [0, 32], sizes = [8, 32], strides = [1, 1]} : vector<8x64xf32> to vector<8x32xf32>
    %199 = vector.extract_strided_slice %75 {offsets = [0, 32], sizes = [8, 32], strides = [1, 1]} : vector<8x64xf32> to vector<8x32xf32>
    %200 = vector.extract_strided_slice %57 {offsets = [0, 32], sizes = [8, 32], strides = [1, 1]} : vector<8x64xf32> to vector<8x32xf32>
    %201 = tpu.concatenate %193, %194, %195, %196, %197, %198, %199, %200 in 0 : vector<8x32xf32>, vector<8x32xf32>, vector<8x32xf32>, vector<8x32xf32>, vector<8x32xf32>, vector<8x32xf32>, vector<8x32xf32>, vector<8x32xf32> -> vector<64x32xf32>
    %202 = tpu.concatenate %192, %201 in 1 : vector<64x32xf32>, vector<64x32xf32> -> vector<64x64xf32>
    %203 = arith.truncf %202 : vector<64x64xf32> to vector<64x64xbf16>
    %c0_24 = arith.constant 0 : index
    %c0_25 = arith.constant 0 : index
    %204 = vector.load %arg4[%c0_24, %c0_25] : memref<64x256xbf16, #tpu.memory_space<vmem>>, vector<64x256xbf16>
    %cst_26 = arith.constant dense<0.000000e+00> : vector<64x256xf32>
    %205 = tpu.matmul %203, %204, %cst_26 {dimension_numbers = #tpu.dot_dimension_numbers<[1], [0], [0], [1], [0, 0, 1, 1], [], []>} : vector<64x64xbf16>, vector<64x256xbf16>, vector<64x256xf32> -> vector<64x256xf32>
    %c0_27 = arith.constant 0 : index
    %c0_28 = arith.constant 0 : index
    %206 = vector.load %arg5[%c0_27, %c0_28] : memref<1x256xf32, #tpu.memory_space<vmem>>, vector<1x256xf32>
    %207 = vector.broadcast %206 : vector<1x256xf32> to vector<64x256xf32>
    %208 = arith.addf %205, %207 : vector<64x256xf32>
    %c0_29 = arith.constant 0 : index
    %c0_30 = arith.constant 0 : index
    %209 = vector.load %arg6[%c0_29, %c0_30] : memref<64x256xbf16, #tpu.memory_space<vmem>>, vector<64x256xbf16>
    %cst_31 = arith.constant 0.000000e+00 : f32
    %210 = vector.broadcast %cst_31 : f32 to vector<8x64xf32>
    %cst_32 = arith.constant 0.000000e+00 : f32
    %211 = vector.broadcast %cst_32 : f32 to vector<8x64xf32>
    %212 = vector.extract_strided_slice %208 {offsets = [0, 0], sizes = [8, 256], strides = [1, 1]} : vector<64x256xf32> to vector<8x256xf32>
    %213 = vector.extract_strided_slice %208 {offsets = [56, 0], sizes = [8, 256], strides = [1, 1]} : vector<64x256xf32> to vector<8x256xf32>
    %214 = arith.select %29, %212, %213 : vector<8x256xi1>, vector<8x256xf32>
    %215 = arith.truncf %210 : vector<8x64xf32> to vector<8x64xbf16>
    %cst_33 = arith.constant dense<0.000000e+00> : vector<8x256xf32>
    %216 = tpu.matmul %215, %209, %cst_33 {dimension_numbers = #tpu.dot_dimension_numbers<[1], [0], [0], [1], [0, 0, 1, 1], [], []>} : vector<8x64xbf16>, vector<64x256xbf16>, vector<8x256xf32> -> vector<8x256xf32>
    %217 = arith.addf %214, %216 : vector<8x256xf32>
    %218 = math.tanh %217 : vector<8x256xf32>
    %219 = arith.mulf %218, %8 : vector<8x256xf32>
    %220 = arith.addf %219, %11 : vector<8x256xf32>
    %221 = vector.extract_strided_slice %220 {offsets = [0, 0], sizes = [8, 64], strides = [1, 1]} : vector<8x256xf32> to vector<8x64xf32>
    %222 = vector.extract_strided_slice %220 {offsets = [0, 64], sizes = [8, 64], strides = [1, 1]} : vector<8x256xf32> to vector<8x64xf32>
    %223 = vector.extract_strided_slice %220 {offsets = [0, 128], sizes = [8, 64], strides = [1, 1]} : vector<8x256xf32> to vector<8x64xf32>
    %224 = vector.extract_strided_slice %220 {offsets = [0, 192], sizes = [8, 64], strides = [1, 1]} : vector<8x256xf32> to vector<8x64xf32>
    %225 = arith.mulf %222, %211 : vector<8x64xf32>
    %226 = arith.mulf %221, %223 : vector<8x64xf32>
    %227 = arith.addf %225, %226 : vector<8x64xf32>
    %228 = math.tanh %227 : vector<8x64xf32>
    %229 = arith.mulf %224, %228 : vector<8x64xf32>
    %230 = vector.extract_strided_slice %208 {offsets = [8, 0], sizes = [8, 256], strides = [1, 1]} : vector<64x256xf32> to vector<8x256xf32>
    %231 = vector.extract_strided_slice %208 {offsets = [48, 0], sizes = [8, 256], strides = [1, 1]} : vector<64x256xf32> to vector<8x256xf32>
    %232 = arith.select %29, %230, %231 : vector<8x256xi1>, vector<8x256xf32>
    %233 = arith.truncf %229 : vector<8x64xf32> to vector<8x64xbf16>
    %cst_34 = arith.constant dense<0.000000e+00> : vector<8x256xf32>
    %234 = tpu.matmul %233, %209, %cst_34 {dimension_numbers = #tpu.dot_dimension_numbers<[1], [0], [0], [1], [0, 0, 1, 1], [], []>} : vector<8x64xbf16>, vector<64x256xbf16>, vector<8x256xf32> -> vector<8x256xf32>
    %235 = arith.addf %232, %234 : vector<8x256xf32>
    %236 = math.tanh %235 : vector<8x256xf32>
    %237 = arith.mulf %236, %8 : vector<8x256xf32>
    %238 = arith.addf %237, %11 : vector<8x256xf32>
    %239 = vector.extract_strided_slice %238 {offsets = [0, 0], sizes = [8, 64], strides = [1, 1]} : vector<8x256xf32> to vector<8x64xf32>
    %240 = vector.extract_strided_slice %238 {offsets = [0, 64], sizes = [8, 64], strides = [1, 1]} : vector<8x256xf32> to vector<8x64xf32>
    %241 = vector.extract_strided_slice %238 {offsets = [0, 128], sizes = [8, 64], strides = [1, 1]} : vector<8x256xf32> to vector<8x64xf32>
    %242 = vector.extract_strided_slice %238 {offsets = [0, 192], sizes = [8, 64], strides = [1, 1]} : vector<8x256xf32> to vector<8x64xf32>
    %243 = arith.mulf %240, %227 : vector<8x64xf32>
    %244 = arith.mulf %239, %241 : vector<8x64xf32>
    %245 = arith.addf %243, %244 : vector<8x64xf32>
    %246 = math.tanh %245 : vector<8x64xf32>
    %247 = arith.mulf %242, %246 : vector<8x64xf32>
    %248 = vector.extract_strided_slice %208 {offsets = [16, 0], sizes = [8, 256], strides = [1, 1]} : vector<64x256xf32> to vector<8x256xf32>
    %249 = vector.extract_strided_slice %208 {offsets = [40, 0], sizes = [8, 256], strides = [1, 1]} : vector<64x256xf32> to vector<8x256xf32>
    %250 = arith.select %29, %248, %249 : vector<8x256xi1>, vector<8x256xf32>
    %251 = arith.truncf %247 : vector<8x64xf32> to vector<8x64xbf16>
    %cst_35 = arith.constant dense<0.000000e+00> : vector<8x256xf32>
    %252 = tpu.matmul %251, %209, %cst_35 {dimension_numbers = #tpu.dot_dimension_numbers<[1], [0], [0], [1], [0, 0, 1, 1], [], []>} : vector<8x64xbf16>, vector<64x256xbf16>, vector<8x256xf32> -> vector<8x256xf32>
    %253 = arith.addf %250, %252 : vector<8x256xf32>
    %254 = math.tanh %253 : vector<8x256xf32>
    %255 = arith.mulf %254, %8 : vector<8x256xf32>
    %256 = arith.addf %255, %11 : vector<8x256xf32>
    %257 = vector.extract_strided_slice %256 {offsets = [0, 0], sizes = [8, 64], strides = [1, 1]} : vector<8x256xf32> to vector<8x64xf32>
    %258 = vector.extract_strided_slice %256 {offsets = [0, 64], sizes = [8, 64], strides = [1, 1]} : vector<8x256xf32> to vector<8x64xf32>
    %259 = vector.extract_strided_slice %256 {offsets = [0, 128], sizes = [8, 64], strides = [1, 1]} : vector<8x256xf32> to vector<8x64xf32>
    %260 = vector.extract_strided_slice %256 {offsets = [0, 192], sizes = [8, 64], strides = [1, 1]} : vector<8x256xf32> to vector<8x64xf32>
    %261 = arith.mulf %258, %245 : vector<8x64xf32>
    %262 = arith.mulf %257, %259 : vector<8x64xf32>
    %263 = arith.addf %261, %262 : vector<8x64xf32>
    %264 = math.tanh %263 : vector<8x64xf32>
    %265 = arith.mulf %260, %264 : vector<8x64xf32>
    %266 = vector.extract_strided_slice %208 {offsets = [24, 0], sizes = [8, 256], strides = [1, 1]} : vector<64x256xf32> to vector<8x256xf32>
    %267 = vector.extract_strided_slice %208 {offsets = [32, 0], sizes = [8, 256], strides = [1, 1]} : vector<64x256xf32> to vector<8x256xf32>
    %268 = arith.select %29, %266, %267 : vector<8x256xi1>, vector<8x256xf32>
    %269 = arith.truncf %265 : vector<8x64xf32> to vector<8x64xbf16>
    %cst_36 = arith.constant dense<0.000000e+00> : vector<8x256xf32>
    %270 = tpu.matmul %269, %209, %cst_36 {dimension_numbers = #tpu.dot_dimension_numbers<[1], [0], [0], [1], [0, 0, 1, 1], [], []>} : vector<8x64xbf16>, vector<64x256xbf16>, vector<8x256xf32> -> vector<8x256xf32>
    %271 = arith.addf %268, %270 : vector<8x256xf32>
    %272 = math.tanh %271 : vector<8x256xf32>
    %273 = arith.mulf %272, %8 : vector<8x256xf32>
    %274 = arith.addf %273, %11 : vector<8x256xf32>
    %275 = vector.extract_strided_slice %274 {offsets = [0, 0], sizes = [8, 64], strides = [1, 1]} : vector<8x256xf32> to vector<8x64xf32>
    %276 = vector.extract_strided_slice %274 {offsets = [0, 64], sizes = [8, 64], strides = [1, 1]} : vector<8x256xf32> to vector<8x64xf32>
    %277 = vector.extract_strided_slice %274 {offsets = [0, 128], sizes = [8, 64], strides = [1, 1]} : vector<8x256xf32> to vector<8x64xf32>
    %278 = vector.extract_strided_slice %274 {offsets = [0, 192], sizes = [8, 64], strides = [1, 1]} : vector<8x256xf32> to vector<8x64xf32>
    %279 = arith.mulf %276, %263 : vector<8x64xf32>
    %280 = arith.mulf %275, %277 : vector<8x64xf32>
    %281 = arith.addf %279, %280 : vector<8x64xf32>
    %282 = math.tanh %281 : vector<8x64xf32>
    %283 = arith.mulf %278, %282 : vector<8x64xf32>
    %284 = vector.extract_strided_slice %208 {offsets = [32, 0], sizes = [8, 256], strides = [1, 1]} : vector<64x256xf32> to vector<8x256xf32>
    %285 = vector.extract_strided_slice %208 {offsets = [24, 0], sizes = [8, 256], strides = [1, 1]} : vector<64x256xf32> to vector<8x256xf32>
    %286 = arith.select %29, %284, %285 : vector<8x256xi1>, vector<8x256xf32>
    %287 = arith.truncf %283 : vector<8x64xf32> to vector<8x64xbf16>
    %cst_37 = arith.constant dense<0.000000e+00> : vector<8x256xf32>
    %288 = tpu.matmul %287, %209, %cst_37 {dimension_numbers = #tpu.dot_dimension_numbers<[1], [0], [0], [1], [0, 0, 1, 1], [], []>} : vector<8x64xbf16>, vector<64x256xbf16>, vector<8x256xf32> -> vector<8x256xf32>
    %289 = arith.addf %286, %288 : vector<8x256xf32>
    %290 = math.tanh %289 : vector<8x256xf32>
    %291 = arith.mulf %290, %8 : vector<8x256xf32>
    %292 = arith.addf %291, %11 : vector<8x256xf32>
    %293 = vector.extract_strided_slice %292 {offsets = [0, 0], sizes = [8, 64], strides = [1, 1]} : vector<8x256xf32> to vector<8x64xf32>
    %294 = vector.extract_strided_slice %292 {offsets = [0, 64], sizes = [8, 64], strides = [1, 1]} : vector<8x256xf32> to vector<8x64xf32>
    %295 = vector.extract_strided_slice %292 {offsets = [0, 128], sizes = [8, 64], strides = [1, 1]} : vector<8x256xf32> to vector<8x64xf32>
    %296 = vector.extract_strided_slice %292 {offsets = [0, 192], sizes = [8, 64], strides = [1, 1]} : vector<8x256xf32> to vector<8x64xf32>
    %297 = arith.mulf %294, %281 : vector<8x64xf32>
    %298 = arith.mulf %293, %295 : vector<8x64xf32>
    %299 = arith.addf %297, %298 : vector<8x64xf32>
    %300 = math.tanh %299 : vector<8x64xf32>
    %301 = arith.mulf %296, %300 : vector<8x64xf32>
    %302 = vector.extract_strided_slice %208 {offsets = [40, 0], sizes = [8, 256], strides = [1, 1]} : vector<64x256xf32> to vector<8x256xf32>
    %303 = vector.extract_strided_slice %208 {offsets = [16, 0], sizes = [8, 256], strides = [1, 1]} : vector<64x256xf32> to vector<8x256xf32>
    %304 = arith.select %29, %302, %303 : vector<8x256xi1>, vector<8x256xf32>
    %305 = arith.truncf %301 : vector<8x64xf32> to vector<8x64xbf16>
    %cst_38 = arith.constant dense<0.000000e+00> : vector<8x256xf32>
    %306 = tpu.matmul %305, %209, %cst_38 {dimension_numbers = #tpu.dot_dimension_numbers<[1], [0], [0], [1], [0, 0, 1, 1], [], []>} : vector<8x64xbf16>, vector<64x256xbf16>, vector<8x256xf32> -> vector<8x256xf32>
    %307 = arith.addf %304, %306 : vector<8x256xf32>
    %308 = math.tanh %307 : vector<8x256xf32>
    %309 = arith.mulf %308, %8 : vector<8x256xf32>
    %310 = arith.addf %309, %11 : vector<8x256xf32>
    %311 = vector.extract_strided_slice %310 {offsets = [0, 0], sizes = [8, 64], strides = [1, 1]} : vector<8x256xf32> to vector<8x64xf32>
    %312 = vector.extract_strided_slice %310 {offsets = [0, 64], sizes = [8, 64], strides = [1, 1]} : vector<8x256xf32> to vector<8x64xf32>
    %313 = vector.extract_strided_slice %310 {offsets = [0, 128], sizes = [8, 64], strides = [1, 1]} : vector<8x256xf32> to vector<8x64xf32>
    %314 = vector.extract_strided_slice %310 {offsets = [0, 192], sizes = [8, 64], strides = [1, 1]} : vector<8x256xf32> to vector<8x64xf32>
    %315 = arith.mulf %312, %299 : vector<8x64xf32>
    %316 = arith.mulf %311, %313 : vector<8x64xf32>
    %317 = arith.addf %315, %316 : vector<8x64xf32>
    %318 = math.tanh %317 : vector<8x64xf32>
    %319 = arith.mulf %314, %318 : vector<8x64xf32>
    %320 = vector.extract_strided_slice %208 {offsets = [48, 0], sizes = [8, 256], strides = [1, 1]} : vector<64x256xf32> to vector<8x256xf32>
    %321 = vector.extract_strided_slice %208 {offsets = [8, 0], sizes = [8, 256], strides = [1, 1]} : vector<64x256xf32> to vector<8x256xf32>
    %322 = arith.select %29, %320, %321 : vector<8x256xi1>, vector<8x256xf32>
    %323 = arith.truncf %319 : vector<8x64xf32> to vector<8x64xbf16>
    %cst_39 = arith.constant dense<0.000000e+00> : vector<8x256xf32>
    %324 = tpu.matmul %323, %209, %cst_39 {dimension_numbers = #tpu.dot_dimension_numbers<[1], [0], [0], [1], [0, 0, 1, 1], [], []>} : vector<8x64xbf16>, vector<64x256xbf16>, vector<8x256xf32> -> vector<8x256xf32>
    %325 = arith.addf %322, %324 : vector<8x256xf32>
    %326 = math.tanh %325 : vector<8x256xf32>
    %327 = arith.mulf %326, %8 : vector<8x256xf32>
    %328 = arith.addf %327, %11 : vector<8x256xf32>
    %329 = vector.extract_strided_slice %328 {offsets = [0, 0], sizes = [8, 64], strides = [1, 1]} : vector<8x256xf32> to vector<8x64xf32>
    %330 = vector.extract_strided_slice %328 {offsets = [0, 64], sizes = [8, 64], strides = [1, 1]} : vector<8x256xf32> to vector<8x64xf32>
    %331 = vector.extract_strided_slice %328 {offsets = [0, 128], sizes = [8, 64], strides = [1, 1]} : vector<8x256xf32> to vector<8x64xf32>
    %332 = vector.extract_strided_slice %328 {offsets = [0, 192], sizes = [8, 64], strides = [1, 1]} : vector<8x256xf32> to vector<8x64xf32>
    %333 = arith.mulf %330, %317 : vector<8x64xf32>
    %334 = arith.mulf %329, %331 : vector<8x64xf32>
    %335 = arith.addf %333, %334 : vector<8x64xf32>
    %336 = math.tanh %335 : vector<8x64xf32>
    %337 = arith.mulf %332, %336 : vector<8x64xf32>
    %338 = vector.extract_strided_slice %208 {offsets = [56, 0], sizes = [8, 256], strides = [1, 1]} : vector<64x256xf32> to vector<8x256xf32>
    %339 = vector.extract_strided_slice %208 {offsets = [0, 0], sizes = [8, 256], strides = [1, 1]} : vector<64x256xf32> to vector<8x256xf32>
    %340 = arith.select %29, %338, %339 : vector<8x256xi1>, vector<8x256xf32>
    %341 = arith.truncf %337 : vector<8x64xf32> to vector<8x64xbf16>
    %cst_40 = arith.constant dense<0.000000e+00> : vector<8x256xf32>
    %342 = tpu.matmul %341, %209, %cst_40 {dimension_numbers = #tpu.dot_dimension_numbers<[1], [0], [0], [1], [0, 0, 1, 1], [], []>} : vector<8x64xbf16>, vector<64x256xbf16>, vector<8x256xf32> -> vector<8x256xf32>
    %343 = arith.addf %340, %342 : vector<8x256xf32>
    %344 = math.tanh %343 : vector<8x256xf32>
    %345 = arith.mulf %344, %8 : vector<8x256xf32>
    %346 = arith.addf %345, %11 : vector<8x256xf32>
    %347 = vector.extract_strided_slice %346 {offsets = [0, 0], sizes = [8, 64], strides = [1, 1]} : vector<8x256xf32> to vector<8x64xf32>
    %348 = vector.extract_strided_slice %346 {offsets = [0, 64], sizes = [8, 64], strides = [1, 1]} : vector<8x256xf32> to vector<8x64xf32>
    %349 = vector.extract_strided_slice %346 {offsets = [0, 128], sizes = [8, 64], strides = [1, 1]} : vector<8x256xf32> to vector<8x64xf32>
    %350 = vector.extract_strided_slice %346 {offsets = [0, 192], sizes = [8, 64], strides = [1, 1]} : vector<8x256xf32> to vector<8x64xf32>
    %351 = arith.mulf %348, %335 : vector<8x64xf32>
    %352 = arith.mulf %347, %349 : vector<8x64xf32>
    %353 = arith.addf %351, %352 : vector<8x64xf32>
    %354 = math.tanh %353 : vector<8x64xf32>
    %355 = arith.mulf %350, %354 : vector<8x64xf32>
    %c0_41 = arith.constant 0 : index
    %c0_42 = arith.constant 0 : index
    %356 = vector.load %arg7[%c0_41, %c0_42] : memref<8x64xf32, #tpu.memory_space<vmem>>, vector<8x64xf32>
    tpu.vector_store %arg7[%c0_41, %c0_42], %355 {strides = array<i32>} : memref<8x64xf32, #tpu.memory_space<vmem>>, vector<8x64xf32>,
    return
  }
}

</mosaic_0001>

<llo_original>
// kernel: _lambda_.1
$region0: #{_lambda_.1}
  #allocation0 [shape = 'u32[]', space=smem, size = 0x4, offset = 0x4, fixed_abs, tag = 'smem constant byte address 0x4 - core index']
  #allocation1 [shape = 'u32[144,128]{1,0:T(1,128)}', space=vmem, size = 0x12000, scoped, tag = 'internal scratch']
  %s0 = inlined_call_operand.vmem [shape: f32[64,16], index: 0, kind: input, shape index: {}]
  %s1 = inlined_call_operand.vmem [shape: bf16[16,256], index: 1, kind: input, shape index: {}]
  %s2 = inlined_call_operand.vmem [shape: f32[1,256], index: 2, kind: input, shape index: {}]
  %s3 = inlined_call_operand.vmem [shape: bf16[64,256], index: 3, kind: input, shape index: {}]
  %s4 = inlined_call_operand.vmem [shape: bf16[64,256], index: 4, kind: input, shape index: {}]
  %s5 = inlined_call_operand.vmem [shape: f32[1,256], index: 5, kind: input, shape index: {}]
  %s6 = inlined_call_operand.vmem [shape: bf16[64,256], index: 6, kind: input, shape index: {}]
  %s7 = inlined_call_operand.vmem [shape: f32[8,64], index: 7, kind: output, shape index: {}]
  %s8 = sld [smem:[#allocation0]]
  $region38: #{_lambda_.1} parent=0
    _
  %s10 = ssub.s32 1, %s8
  %s11 = scalar_select 0, %s10, %s8
  // Predicated region
  $region2: #{_lambda_.1} parent=0 // pred_check
    _
  $region3: #{_lambda_.1} parent=0 // pred_check_branch
    %13 = sbr.rel (0) target = $region5
  $region4: #{_lambda_.1} parent=0 // pred_region
    _
  $region5: #{_lambda_.1} parent=0 // pred_fallthru
    _
  // Predicated region
  $region6: #{_lambda_.1} parent=0 // pred_check
    _
  $region7: #{_lambda_.1} parent=0 // pred_check_branch
    %15 = sbr.rel (0) target = $region9
  $region8: #{_lambda_.1} parent=0 // pred_region
    _
  $region9: #{_lambda_.1} parent=0 // pred_fallthru
    _
  // Predicated region
  $region10: #{_lambda_.1} parent=0 // pred_check
    _
  $region11: #{_lambda_.1} parent=0 // pred_check_branch
    %17 = sbr.rel (0) target = $region13
  $region12: #{_lambda_.1} parent=0 // pred_region
    _
  $region13: #{_lambda_.1} parent=0 // pred_fallthru
    _
  // Predicated region
  $region14: #{_lambda_.1} parent=0 // pred_check
    _
  $region15: #{_lambda_.1} parent=0 // pred_check_branch
    %19 = sbr.rel (0) target = $region17
  $region16: #{_lambda_.1} parent=0 // pred_region
    _
  $region17: #{_lambda_.1} parent=0 // pred_fallthru
    _
  // Predicated region
  $region18: #{_lambda_.1} parent=0 // pred_check
    _
  $region19: #{_lambda_.1} parent=0 // pred_check_branch
    %21 = sbr.rel (0) target = $region21
  $region20: #{_lambda_.1} parent=0 // pred_region
    _
  $region21: #{_lambda_.1} parent=0 // pred_fallthru
    _
  // Predicated region
  $region22: #{_lambda_.1} parent=0 // pred_check
    _
  $region23: #{_lambda_.1} parent=0 // pred_check_branch
    %23 = sbr.rel (0) target = $region25
  $region24: #{_lambda_.1} parent=0 // pred_region
    _
  $region25: #{_lambda_.1} parent=0 // pred_fallthru
    _
  // Predicated region
  $region26: #{_lambda_.1} parent=0 // pred_check
    _
  $region27: #{_lambda_.1} parent=0 // pred_check_branch
    %25 = sbr.rel (0) target = $region29
  $region28: #{_lambda_.1} parent=0 // pred_region
    _
  $region29: #{_lambda_.1} parent=0 // pred_fallthru
    _
  %v27 = vlaneseq
  %v28 = vand.u32 %v27, 127
  %v29 = vadd.s32 %v28, 128
  %vm30 = vcmp.ge.s32.totalorder %v28, 128
  %vm31 = vcmp.ge.s32.totalorder %v29, 128
  %vm32 = vcmp.lt.s32.totalorder %v28, 192
  %vm33 = vcmp.lt.s32.totalorder %v29, 192
  %vm34 = vmand %vm30, %vm32
  %vm35 = vmand %vm31, %vm33
  %v36 = vsel %vm34, 1.0, 0.5
  %v37 = vsel %vm35, 1.0, 0.5
  %v38 = vsel %vm34, 0.0, 0.5
  %v39 = vsel %vm35, 0.0, 0.5
  %vm40 = vcmp.lt.s32.totalorder %v28, 0
  %v41 = vsub.s32 0, %v28
  %v42 = vsel %vm40, %v41, %v28
  %v43 = vshrl.u32 %v42, 6
  %v44 = vand.u32 %v42, 63
  %v45 = vsub.s32 0, %v44
  %v46 = vsel %vm40, %v45, %v44
  %vm47 = vcmp.lt.s32.totalorder %v29, 0
  %v48 = vsub.s32 0, %v29
  %v49 = vsel %vm47, %v48, %v29
  %v50 = vshrl.u32 %v49, 6
  %v51 = vand.u32 %v49, 63
  %v52 = vsub.s32 0, %v51
  %v53 = vsel %vm47, %v52, %v51
  %vm54 = vcmp.ne.s32.totalorder %v46, 0
  %vm55 = vcmp.ne.s32.totalorder %v53, 0
  %vm56 = vcmp.lt.s32.totalorder %v46, 0
  %vm57 = vcmp.lt.s32.totalorder %v53, 0
  %vm58 = vmand %vm56, %vm54
  %vm59 = vmand %vm57, %vm55
  %v60 = vadd.s32 %v46, 64
  %v61 = vadd.s32 %v53, 64
  %v62 = vsel %vm58, %v60, %v46
  %v63 = vsel %vm59, %v61, %v53
  %vm64 = vcmp.lt.s32.totalorder %v62, 32
  %vm65 = vcmp.lt.s32.totalorder %v63, 32
  %v66 = vld [vmem:[%s0] sm:$0xff]
  %v67 = vld [vmem:[%s0 + $0x8] sm:$0xff]
  %v68 = vld [vmem:[%s0 + $0x10] sm:$0xff]
  %v69 = vld [vmem:[%s0 + $0x18] sm:$0xff]
  %v70 = vld [vmem:[%s0 + $0x20] sm:$0xff]
  %v71 = vld [vmem:[%s0 + $0x28] sm:$0xff]
  %v72 = vld [vmem:[%s0 + $0x30] sm:$0xff]
  %v73 = vld [vmem:[%s0 + $0x38] sm:$0xff]
  %v74 = vpack.c.bf16 %v67, %v66
  %v75 = vpack.c.bf16 %v69, %v68
  %v76 = vpack.c.bf16 %v71, %v70
  %v77 = vpack.c.bf16 %v73, %v72
  %v78 = vld [vmem:[%s1] sm:$0xff]
  %v79 = vld [vmem:[%s1 + $0x8] sm:$0xff]
  %v80 = vld [vmem:[%s2] sm:$0x3]
  %v82 = vlaneseq
  %v83 = vshrl.u32 %v82, 7
  %v84 = vsub.s32 0, %v83
  %v85 = vrot.slane %v80, %v84
  %v86 = vlaneseq
  %v87 = vshrl.u32 %v86, 7
  %v88 = vsub.s32 1, %v87
  %v89 = vrot.slane %v80, %v88
  %v94 = vunpack.c.l.b16 %v78
  %v95 = vunpack.c.h.b16 %v78
  %v96 = vunpack.c.l.b16 %v79
  %v97 = vunpack.c.h.b16 %v79
  %v98 = vpack.c.b16 %v96, %v94
  %v99 = vpack.c.b16 %v97, %v95
  %vm102 = vcmask 130048
  %v104 = vsel %vm102, %v74, 0
  %v107 = vsel %vm102, %v75, 0
  %v110 = vsel %vm102, %v76, 0
  %v113 = vsel %vm102, %v77, 0
  %115 = vmatprep.subr.bf16.mxu0 %v99
  %116 = vmatpush1.bf16.msra.mxu0 %v98
  %117 = vmatprep.subr.bf16.mxu0 0
  %118 = vmatpush1.bf16.msra.mxu0 0
  %119 = vmatprep.subr.bf16.mxu0 0
  %120 = vmatpush1.bf16.msra.mxu0 0
  %121 = vmatprep.subr.bf16.mxu0 0
  %122 = vmatpush1.bf16.msra.mxu0 0
  %123 = vmatprep.subr.bf16.mxu0 0
  %124 = vmatpush1.bf16.msra.mxu0 0
  %125 = vmatprep.subr.bf16.mxu0 0
  %126 = vmatpush1.bf16.msra.mxu0 0
  %127 = vmatprep.subr.bf16.mxu0 0
  %128 = vmatpush1.bf16.msra.mxu0 0
  %129 = vmatprep.subr.bf16.mxu0 0
  %130 = vmatpush1.bf16.msra.mxu0 0
  %131 = vmatprep.subr.bf16.mxu0 0
  %132 = vmatpush1.bf16.msra.mxu0 0
  %133 = vmatprep.subr.bf16.mxu0 0
  %134 = vmatpush1.bf16.msra.mxu0 0
  %135 = vmatprep.subr.bf16.mxu0 0
  %136 = vmatpush1.bf16.msra.mxu0 0
  %137 = vmatprep.subr.bf16.mxu0 0
  %138 = vmatpush1.bf16.msra.mxu0 0
  %139 = vmatprep.subr.bf16.mxu0 0
  %140 = vmatpush1.bf16.msra.mxu0 0
  %141 = vmatprep.subr.bf16.mxu0 0
  %142 = vmatpush1.bf16.msra.mxu0 0
  %143 = vmatprep.subr.bf16.mxu0 0
  %144 = vmatpush1.bf16.msra.mxu0 0
  %145 = vmatprep.subr.bf16.mxu0 0
  %146 = vmatpush1.bf16.msra.mxu0 0
  %147 = vmatprep.mubr.bf16.mxu0 0
  %148 = vmatmul.mubr.bf16.gmra.mrb[0].mxu0 %v104
  %v149 = vpop.f32.mrb[0].mxu0
  %v150 = vadd.f32 %v85, %v149
  %v151 = vpop.f32.mrb[0].mxu0
  %v152 = vadd.f32 %v89, %v151
  %v153 = vpop.f32.mrb[0].mxu0
  %v154 = vadd.f32 %v85, %v153
  %v155 = vpop.f32.mrb[0].mxu0
  %v156 = vadd.f32 %v89, %v155
  %157 = vmatprep.mubr.bf16.mxu0 0
  %158 = vmatmul.mubr.bf16.gmra.mrb[0].mxu0 %v107
  %v159 = vpop.f32.mrb[0].mxu0
  %v160 = vadd.f32 %v85, %v159
  %v161 = vpop.f32.mrb[0].mxu0
  %v162 = vadd.f32 %v89, %v161
  %v163 = vpop.f32.mrb[0].mxu0
  %v164 = vadd.f32 %v85, %v163
  %v165 = vpop.f32.mrb[0].mxu0
  %v166 = vadd.f32 %v89, %v165
  %167 = vmatprep.mubr.bf16.mxu0 0
  %168 = vmatmul.mubr.bf16.gmra.mrb[0].mxu0 %v110
  %v169 = vpop.f32.mrb[0].mxu0
  %v170 = vadd.f32 %v85, %v169
  %v171 = vpop.f32.mrb[0].mxu0
  %v172 = vadd.f32 %v89, %v171
  %v173 = vpop.f32.mrb[0].mxu0
  %v174 = vadd.f32 %v85, %v173
  %v175 = vpop.f32.mrb[0].mxu0
  %v176 = vadd.f32 %v89, %v175
  %177 = vmatprep.mubr.bf16.mxu0 0
  %178 = vmatmul.mubr.bf16.gmra.mrb[0].mxu0 %v113
  %v179 = vpop.f32.mrb[0].mxu0
  %v180 = vadd.f32 %v85, %v179
  %v181 = vpop.f32.mrb[0].mxu0
  %v182 = vadd.f32 %v89, %v181
  %v183 = vpop.f32.mrb[0].mxu0
  %v184 = vadd.f32 %v85, %v183
  %v185 = vpop.f32.mrb[0].mxu0
  %v186 = vadd.f32 %v89, %v185
  %187 = vdwg.mxu0
  %v188 = vld [vmem:[%s3] sm:$0xff]
  %v189 = vld [vmem:[%s3 + $0x8] sm:$0xff]
  %v190 = vld [vmem:[%s3 + $0x10] sm:$0xff]
  %v191 = vld [vmem:[%s3 + $0x18] sm:$0xff]
  %v192 = vld [vmem:[%s3 + $0x20] sm:$0xff]
  %v193 = vld [vmem:[%s3 + $0x28] sm:$0xff]
  %v194 = vld [vmem:[%s3 + $0x30] sm:$0xff]
  %v195 = vld [vmem:[%s3 + $0x38] sm:$0xff]
  %v196 = vsel %vm64, %v150, %v184
  %v197 = vsel %vm65, %v152, %v186
  %v206 = vunpack.c.l.b16 %v188
  %v207 = vunpack.c.h.b16 %v188
  %v208 = vunpack.c.l.b16 %v189
  %v209 = vunpack.c.h.b16 %v189
  %v210 = vunpack.c.l.b16 %v190
  %v211 = vunpack.c.h.b16 %v190
  %v212 = vunpack.c.l.b16 %v191
  %v213 = vunpack.c.h.b16 %v191
  %v214 = vunpack.c.l.b16 %v192
  %v215 = vunpack.c.h.b16 %v192
  %v216 = vunpack.c.l.b16 %v193
  %v217 = vunpack.c.h.b16 %v193
  %v218 = vunpack.c.l.b16 %v194
  %v219 = vunpack.c.h.b16 %v194
  %v220 = vunpack.c.l.b16 %v195
  %v221 = vunpack.c.h.b16 %v195
  %v222 = vpack.c.b16 %v208, %v206
  %v223 = vpack.c.b16 %v209, %v207
  %v224 = vpack.c.b16 %v212, %v210
  %v225 = vpack.c.b16 %v213, %v211
  %v226 = vpack.c.b16 %v216, %v214
  %v227 = vpack.c.b16 %v217, %v215
  %v228 = vpack.c.b16 %v220, %v218
  %v229 = vpack.c.b16 %v221, %v219
  %vm238 = vcmask 523264
  %v240 = vsel %vm238, 0, 0
  %242 = vmatprep.subr.bf16.mxu0 %v223
  %243 = vmatpush1.bf16.msra.mxu0 %v222
  %244 = vmatprep.subr.bf16.mxu0 %v225
  %245 = vmatpush1.bf16.msra.mxu0 %v224
  %246 = vmatprep.subr.bf16.mxu0 %v227
  %247 = vmatpush1.bf16.msra.mxu0 %v226
  %248 = vmatprep.subr.bf16.mxu0 %v229
  %249 = vmatpush1.bf16.msra.mxu0 %v228
  %250 = vmatprep.subr.bf16.mxu0 0
  %251 = vmatpush1.bf16.msra.mxu0 0
  %252 = vmatprep.subr.bf16.mxu0 0
  %253 = vmatpush1.bf16.msra.mxu0 0
  %254 = vmatprep.subr.bf16.mxu0 0
  %255 = vmatpush1.bf16.msra.mxu0 0
  %256 = vmatprep.subr.bf16.mxu0 0
  %257 = vmatpush1.bf16.msra.mxu0 0
  %258 = vmatprep.subr.bf16.mxu0 0
  %259 = vmatpush1.bf16.msra.mxu0 0
  %260 = vmatprep.subr.bf16.mxu0 0
  %261 = vmatpush1.bf16.msra.mxu0 0
  %262 = vmatprep.subr.bf16.mxu0 0
  %263 = vmatpush1.bf16.msra.mxu0 0
  %264 = vmatprep.subr.bf16.mxu0 0
  %265 = vmatpush1.bf16.msra.mxu0 0
  %266 = vmatprep.subr.bf16.mxu0 0
  %267 = vmatpush1.bf16.msra.mxu0 0
  %268 = vmatprep.subr.bf16.mxu0 0
  %269 = vmatpush1.bf16.msra.mxu0 0
  %270 = vmatprep.subr.bf16.mxu0 0
  %271 = vmatpush1.bf16.msra.mxu0 0
  %272 = vmatprep.subr.bf16.mxu0 0
  %273 = vmatpush1.bf16.msra.mxu0 0
  %274 = vmatprep.mubr.bf16.mxu0 0
  %275 = vmatmul.mubr.bf16.gmra.mrb[0].mxu0 %v240
  %v276 = vpop.f32.mrb[0].mxu0
  %v277 = vadd.f32 0.0, %v276
  %v278 = vpop.f32.mrb[0].mxu0
  %v279 = vadd.f32 0.0, %v278
  %v280 = vpop.f32.mrb[0].mxu0
  %v281 = vpop.f32.mrb[0].mxu0
  %282 = vdwg.mxu0
  %v283 = vadd.f32 %v196, %v277
  %v284 = vadd.f32 %v197, %v279
  %v285 = vtanh.pop %v283
  %v286 = vtanh.pop %v284
  %v287 = vmul.f32 %v285, %v36
  %v288 = vmul.f32 %v286, %v37
  %v289 = vadd.f32 %v287, %v38
  %v290 = vadd.f32 %v288, %v39
  %v291 = vmul.f32 %v289, 0.0
  %v292 = vmul.f32 %v289, %v290
  %294 = vrot.lane.b32.xlu0 %v292, 64
  %v295 = vpop.permute.xlu0 %294
  %v297 = vadd.f32 %v291, %v295
  %v298 = vtanh.pop %v297
  %v299 = vmul.f32 %v290, %v298
  %v300 = vsel %vm64, %v154, %v180
  %v301 = vsel %vm65, %v156, %v182
  %v302 = vpack.c.bf16 %v299, %v299
  %304 = vrot.lane.b32.xlu0 %v302, 64
  %v305 = vpop.permute.xlu0 %304
  %v307 = vsel %vm238, %v305, 0
  %309 = vmatprep.subr.bf16.mxu0 %v223
  %310 = vmatpush1.bf16.msra.mxu0 %v222
  %311 = vmatprep.subr.bf16.mxu0 %v225
  %312 = vmatpush1.bf16.msra.mxu0 %v224
  %313 = vmatprep.subr.bf16.mxu0 %v227
  %314 = vmatpush1.bf16.msra.mxu0 %v226
  %315 = vmatprep.subr.bf16.mxu0 %v229
  %316 = vmatpush1.bf16.msra.mxu0 %v228
  %317 = vmatprep.subr.bf16.mxu0 0
  %318 = vmatpush1.bf16.msra.mxu0 0
  %319 = vmatprep.subr.bf16.mxu0 0
  %320 = vmatpush1.bf16.msra.mxu0 0
  %321 = vmatprep.subr.bf16.mxu0 0
  %322 = vmatpush1.bf16.msra.mxu0 0
  %323 = vmatprep.subr.bf16.mxu0 0
  %324 = vmatpush1.bf16.msra.mxu0 0
  %325 = vmatprep.subr.bf16.mxu0 0
  %326 = vmatpush1.bf16.msra.mxu0 0
  %327 = vmatprep.subr.bf16.mxu0 0
  %328 = vmatpush1.bf16.msra.mxu0 0
  %329 = vmatprep.subr.bf16.mxu0 0
  %330 = vmatpush1.bf16.msra.mxu0 0
  %331 = vmatprep.subr.bf16.mxu0 0
  %332 = vmatpush1.bf16.msra.mxu0 0
  %333 = vmatprep.subr.bf16.mxu0 0
  %334 = vmatpush1.bf16.msra.mxu0 0
  %335 = vmatprep.subr.bf16.mxu0 0
  %336 = vmatpush1.bf16.msra.mxu0 0
  %337 = vmatprep.subr.bf16.mxu0 0
  %338 = vmatpush1.bf16.msra.mxu0 0
  %339 = vmatprep.subr.bf16.mxu0 0
  %340 = vmatpush1.bf16.msra.mxu0 0
  %341 = vmatprep.mubr.bf16.mxu0 0
  %342 = vmatmul.mubr.bf16.gmra.mrb[0].mxu0 %v307
  %v343 = vpop.f32.mrb[0].mxu0
  %v344 = vadd.f32 0.0, %v343
  %v345 = vpop.f32.mrb[0].mxu0
  %v346 = vadd.f32 0.0, %v345
  %v347 = vpop.f32.mrb[0].mxu0
  %v348 = vpop.f32.mrb[0].mxu0
  %349 = vdwg.mxu0
  %v350 = vadd.f32 %v300, %v344
  %v351 = vadd.f32 %v301, %v346
  %v352 = vtanh.pop %v350
  %v353 = vtanh.pop %v351
  %v354 = vmul.f32 %v352, %v36
  %v355 = vmul.f32 %v353, %v37
  %v356 = vadd.f32 %v354, %v38
  %v357 = vadd.f32 %v355, %v39
  %v358 = vmul.f32 %v356, %v297
  %v359 = vmul.f32 %v356, %v357
  %361 = vrot.lane.b32.xlu0 %v359, 64
  %v362 = vpop.permute.xlu0 %361
  %v364 = vadd.f32 %v358, %v362
  %v365 = vtanh.pop %v364
  %v366 = vmul.f32 %v357, %v365
  %v367 = vsel %vm64, %v160, %v174
  %v368 = vsel %vm65, %v162, %v176
  %v369 = vpack.c.bf16 %v366, %v366
  %371 = vrot.lane.b32.xlu0 %v369, 64
  %v372 = vpop.permute.xlu0 %371
  %v374 = vsel %vm238, %v372, 0
  %376 = vmatprep.subr.bf16.mxu0 %v223
  %377 = vmatpush1.bf16.msra.mxu0 %v222
  %378 = vmatprep.subr.bf16.mxu0 %v225
  %379 = vmatpush1.bf16.msra.mxu0 %v224
  %380 = vmatprep.subr.bf16.mxu0 %v227
  %381 = vmatpush1.bf16.msra.mxu0 %v226
  %382 = vmatprep.subr.bf16.mxu0 %v229
  %383 = vmatpush1.bf16.msra.mxu0 %v228
  %384 = vmatprep.subr.bf16.mxu0 0
  %385 = vmatpush1.bf16.msra.mxu0 0
  %386 = vmatprep.subr.bf16.mxu0 0
  %387 = vmatpush1.bf16.msra.mxu0 0
  %388 = vmatprep.subr.bf16.mxu0 0
  %389 = vmatpush1.bf16.msra.mxu0 0
  %390 = vmatprep.subr.bf16.mxu0 0
  %391 = vmatpush1.bf16.msra.mxu0 0
  %392 = vmatprep.subr.bf16.mxu0 0
  %393 = vmatpush1.bf16.msra.mxu0 0
  %394 = vmatprep.subr.bf16.mxu0 0
  %395 = vmatpush1.bf16.msra.mxu0 0
  %396 = vmatprep.subr.bf16.mxu0 0
  %397 = vmatpush1.bf16.msra.mxu0 0
  %398 = vmatprep.subr.bf16.mxu0 0
  %399 = vmatpush1.bf16.msra.mxu0 0
  %400 = vmatprep.subr.bf16.mxu0 0
  %401 = vmatpush1.bf16.msra.mxu0 0
  %402 = vmatprep.subr.bf16.mxu0 0
  %403 = vmatpush1.bf16.msra.mxu0 0
  %404 = vmatprep.subr.bf16.mxu0 0
  %405 = vmatpush1.bf16.msra.mxu0 0
  %406 = vmatprep.subr.bf16.mxu0 0
  %407 = vmatpush1.bf16.msra.mxu0 0
  %408 = vmatprep.mubr.bf16.mxu0 0
  %409 = vmatmul.mubr.bf16.gmra.mrb[0].mxu0 %v374
  %v410 = vpop.f32.mrb[0].mxu0
  %v411 = vadd.f32 0.0, %v410
  %v412 = vpop.f32.mrb[0].mxu0
  %v413 = vadd.f32 0.0, %v412
  %v414 = vpop.f32.mrb[0].mxu0
  %v415 = vpop.f32.mrb[0].mxu0
  %416 = vdwg.mxu0
  %v417 = vadd.f32 %v367, %v411
  %v418 = vadd.f32 %v368, %v413
  %v419 = vtanh.pop %v417
  %v420 = vtanh.pop %v418
  %v421 = vmul.f32 %v419, %v36
  %v422 = vmul.f32 %v420, %v37
  %v423 = vadd.f32 %v421, %v38
  %v424 = vadd.f32 %v422, %v39
  %v425 = vmul.f32 %v423, %v364
  %v426 = vmul.f32 %v423, %v424
  %428 = vrot.lane.b32.xlu0 %v426, 64
  %v429 = vpop.permute.xlu0 %428
  %v431 = vadd.f32 %v425, %v429
  %v432 = vtanh.pop %v431
  %v433 = vmul.f32 %v424, %v432
  %v434 = vsel %vm64, %v164, %v170
  %v435 = vsel %vm65, %v166, %v172
  %v436 = vpack.c.bf16 %v433, %v433
  %438 = vrot.lane.b32.xlu0 %v436, 64
  %v439 = vpop.permute.xlu0 %438
  %v441 = vsel %vm238, %v439, 0
  %443 = vmatprep.subr.bf16.mxu0 %v223
  %444 = vmatpush1.bf16.msra.mxu0 %v222
  %445 = vmatprep.subr.bf16.mxu0 %v225
  %446 = vmatpush1.bf16.msra.mxu0 %v224
  %447 = vmatprep.subr.bf16.mxu0 %v227
  %448 = vmatpush1.bf16.msra.mxu0 %v226
  %449 = vmatprep.subr.bf16.mxu0 %v229
  %450 = vmatpush1.bf16.msra.mxu0 %v228
  %451 = vmatprep.subr.bf16.mxu0 0
  %452 = vmatpush1.bf16.msra.mxu0 0
  %453 = vmatprep.subr.bf16.mxu0 0
  %454 = vmatpush1.bf16.msra.mxu0 0
  %455 = vmatprep.subr.bf16.mxu0 0
  %456 = vmatpush1.bf16.msra.mxu0 0
  %457 = vmatprep.subr.bf16.mxu0 0
  %458 = vmatpush1.bf16.msra.mxu0 0
  %459 = vmatprep.subr.bf16.mxu0 0
  %460 = vmatpush1.bf16.msra.mxu0 0
  %461 = vmatprep.subr.bf16.mxu0 0
  %462 = vmatpush1.bf16.msra.mxu0 0
  %463 = vmatprep.subr.bf16.mxu0 0
  %464 = vmatpush1.bf16.msra.mxu0 0
  %465 = vmatprep.subr.bf16.mxu0 0
  %466 = vmatpush1.bf16.msra.mxu0 0
  %467 = vmatprep.subr.bf16.mxu0 0
  %468 = vmatpush1.bf16.msra.mxu0 0
  %469 = vmatprep.subr.bf16.mxu0 0
  %470 = vmatpush1.bf16.msra.mxu0 0
  %471 = vmatprep.subr.bf16.mxu0 0
  %472 = vmatpush1.bf16.msra.mxu0 0
  %473 = vmatprep.subr.bf16.mxu0 0
  %474 = vmatpush1.bf16.msra.mxu0 0
  %475 = vmatprep.mubr.bf16.mxu0 0
  %476 = vmatmul.mubr.bf16.gmra.mrb[0].mxu0 %v441
  %v477 = vpop.f32.mrb[0].mxu0
  %v478 = vadd.f32 0.0, %v477
  %v479 = vpop.f32.mrb[0].mxu0
  %v480 = vadd.f32 0.0, %v479
  %v481 = vpop.f32.mrb[0].mxu0
  %v482 = vpop.f32.mrb[0].mxu0
  %483 = vdwg.mxu0
  %v484 = vadd.f32 %v434, %v478
  %v485 = vadd.f32 %v435, %v480
  %v486 = vtanh.pop %v484
  %v487 = vtanh.pop %v485
  %v488 = vmul.f32 %v486, %v36
  %v489 = vmul.f32 %v487, %v37
  %v490 = vadd.f32 %v488, %v38
  %v491 = vadd.f32 %v489, %v39
  %v492 = vmul.f32 %v490, %v431
  %v493 = vmul.f32 %v490, %v491
  %495 = vrot.lane.b32.xlu0 %v493, 64
  %v496 = vpop.permute.xlu0 %495
  %v498 = vadd.f32 %v492, %v496
  %v499 = vtanh.pop %v498
  %v500 = vmul.f32 %v491, %v499
  %v501 = vsel %vm64, %v170, %v164
  %v502 = vsel %vm65, %v172, %v166
  %v503 = vpack.c.bf16 %v500, %v500
  %505 = vrot.lane.b32.xlu0 %v503, 64
  %v506 = vpop.permute.xlu0 %505
  %v508 = vsel %vm238, %v506, 0
  %510 = vmatprep.subr.bf16.mxu0 %v223
  %511 = vmatpush1.bf16.msra.mxu0 %v222
  %512 = vmatprep.subr.bf16.mxu0 %v225
  %513 = vmatpush1.bf16.msra.mxu0 %v224
  %514 = vmatprep.subr.bf16.mxu0 %v227
  %515 = vmatpush1.bf16.msra.mxu0 %v226
  %516 = vmatprep.subr.bf16.mxu0 %v229
  %517 = vmatpush1.bf16.msra.mxu0 %v228
  %518 = vmatprep.subr.bf16.mxu0 0
  %519 = vmatpush1.bf16.msra.mxu0 0
  %520 = vmatprep.subr.bf16.mxu0 0
  %521 = vmatpush1.bf16.msra.mxu0 0
  %522 = vmatprep.subr.bf16.mxu0 0
  %523 = vmatpush1.bf16.msra.mxu0 0
  %524 = vmatprep.subr.bf16.mxu0 0
  %525 = vmatpush1.bf16.msra.mxu0 0
  %526 = vmatprep.subr.bf16.mxu0 0
  %527 = vmatpush1.bf16.msra.mxu0 0
  %528 = vmatprep.subr.bf16.mxu0 0
  %529 = vmatpush1.bf16.msra.mxu0 0
  %530 = vmatprep.subr.bf16.mxu0 0
  %531 = vmatpush1.bf16.msra.mxu0 0
  %532 = vmatprep.subr.bf16.mxu0 0
  %533 = vmatpush1.bf16.msra.mxu0 0
  %534 = vmatprep.subr.bf16.mxu0 0
  %535 = vmatpush1.bf16.msra.mxu0 0
  %536 = vmatprep.subr.bf16.mxu0 0
  %537 = vmatpush1.bf16.msra.mxu0 0
  %538 = vmatprep.subr.bf16.mxu0 0
  %539 = vmatpush1.bf16.msra.mxu0 0
  %540 = vmatprep.subr.bf16.mxu0 0
  %541 = vmatpush1.bf16.msra.mxu0 0
  %542 = vmatprep.mubr.bf16.mxu0 0
  %543 = vmatmul.mubr.bf16.gmra.mrb[0].mxu0 %v508
  %v544 = vpop.f32.mrb[0].mxu0
  %v545 = vadd.f32 0.0, %v544
  %v546 = vpop.f32.mrb[0].mxu0
  %v547 = vadd.f32 0.0, %v546
  %v548 = vpop.f32.mrb[0].mxu0
  %v549 = vpop.f32.mrb[0].mxu0
  %550 = vdwg.mxu0
  %v551 = vadd.f32 %v501, %v545
  %v552 = vadd.f32 %v502, %v547
  %v553 = vtanh.pop %v551
  %v554 = vtanh.pop %v552
  %v555 = vmul.f32 %v553, %v36
  %v556 = vmul.f32 %v554, %v37
  %v557 = vadd.f32 %v555, %v38
  %v558 = vadd.f32 %v556, %v39
  %v559 = vmul.f32 %v557, %v498
  %v560 = vmul.f32 %v557, %v558
  %562 = vrot.lane.b32.xlu0 %v560, 64
  %v563 = vpop.permute.xlu0 %562
  %v565 = vadd.f32 %v559, %v563
  %v566 = vtanh.pop %v565
  %v567 = vmul.f32 %v558, %v566
  %v568 = vsel %vm64, %v174, %v160
  %v569 = vsel %vm65, %v176, %v162
  %v570 = vpack.c.bf16 %v567, %v567
  %572 = vrot.lane.b32.xlu0 %v570, 64
  %v573 = vpop.permute.xlu0 %572
  %v575 = vsel %vm238, %v573, 0
  %577 = vmatprep.subr.bf16.mxu0 %v223
  %578 = vmatpush1.bf16.msra.mxu0 %v222
  %579 = vmatprep.subr.bf16.mxu0 %v225
  %580 = vmatpush1.bf16.msra.mxu0 %v224
  %581 = vmatprep.subr.bf16.mxu0 %v227
  %582 = vmatpush1.bf16.msra.mxu0 %v226
  %583 = vmatprep.subr.bf16.mxu0 %v229
  %584 = vmatpush1.bf16.msra.mxu0 %v228
  %585 = vmatprep.subr.bf16.mxu0 0
  %586 = vmatpush1.bf16.msra.mxu0 0
  %587 = vmatprep.subr.bf16.mxu0 0
  %588 = vmatpush1.bf16.msra.mxu0 0
  %589 = vmatprep.subr.bf16.mxu0 0
  %590 = vmatpush1.bf16.msra.mxu0 0
  %591 = vmatprep.subr.bf16.mxu0 0
  %592 = vmatpush1.bf16.msra.mxu0 0
  %593 = vmatprep.subr.bf16.mxu0 0
  %594 = vmatpush1.bf16.msra.mxu0 0
  %595 = vmatprep.subr.bf16.mxu0 0
  %596 = vmatpush1.bf16.msra.mxu0 0
  %597 = vmatprep.subr.bf16.mxu0 0
  %598 = vmatpush1.bf16.msra.mxu0 0
  %599 = vmatprep.subr.bf16.mxu0 0
  %600 = vmatpush1.bf16.msra.mxu0 0
  %601 = vmatprep.subr.bf16.mxu0 0
  %602 = vmatpush1.bf16.msra.mxu0 0
  %603 = vmatprep.subr.bf16.mxu0 0
  %604 = vmatpush1.bf16.msra.mxu0 0
  %605 = vmatprep.subr.bf16.mxu0 0
  %606 = vmatpush1.bf16.msra.mxu0 0
  %607 = vmatprep.subr.bf16.mxu0 0
  %608 = vmatpush1.bf16.msra.mxu0 0
  %609 = vmatprep.mubr.bf16.mxu0 0
  %610 = vmatmul.mubr.bf16.gmra.mrb[0].mxu0 %v575
  %v611 = vpop.f32.mrb[0].mxu0
  %v612 = vadd.f32 0.0, %v611
  %v613 = vpop.f32.mrb[0].mxu0
  %v614 = vadd.f32 0.0, %v613
  %v615 = vpop.f32.mrb[0].mxu0
  %v616 = vpop.f32.mrb[0].mxu0
  %617 = vdwg.mxu0
  %v618 = vadd.f32 %v568, %v612
  %v619 = vadd.f32 %v569, %v614
  %v620 = vtanh.pop %v618
  %v621 = vtanh.pop %v619
  %v622 = vmul.f32 %v620, %v36
  %v623 = vmul.f32 %v621, %v37
  %v624 = vadd.f32 %v622, %v38
  %v625 = vadd.f32 %v623, %v39
  %v626 = vmul.f32 %v624, %v565
  %v627 = vmul.f32 %v624, %v625
  %629 = vrot.lane.b32.xlu0 %v627, 64
  %v630 = vpop.permute.xlu0 %629
  %v632 = vadd.f32 %v626, %v630
  %v633 = vtanh.pop %v632
  %v634 = vmul.f32 %v625, %v633
  %v635 = vsel %vm64, %v180, %v154
  %v636 = vsel %vm65, %v182, %v156
  %v637 = vpack.c.bf16 %v634, %v634
  %639 = vrot.lane.b32.xlu0 %v637, 64
  %v640 = vpop.permute.xlu0 %639
  %v642 = vsel %vm238, %v640, 0
  %644 = vmatprep.subr.bf16.mxu0 %v223
  %645 = vmatpush1.bf16.msra.mxu0 %v222
  %646 = vmatprep.subr.bf16.mxu0 %v225
  %647 = vmatpush1.bf16.msra.mxu0 %v224
  %648 = vmatprep.subr.bf16.mxu0 %v227
  %649 = vmatpush1.bf16.msra.mxu0 %v226
  %650 = vmatprep.subr.bf16.mxu0 %v229
  %651 = vmatpush1.bf16.msra.mxu0 %v228
  %652 = vmatprep.subr.bf16.mxu0 0
  %653 = vmatpush1.bf16.msra.mxu0 0
  %654 = vmatprep.subr.bf16.mxu0 0
  %655 = vmatpush1.bf16.msra.mxu0 0
  %656 = vmatprep.subr.bf16.mxu0 0
  %657 = vmatpush1.bf16.msra.mxu0 0
  %658 = vmatprep.subr.bf16.mxu0 0
  %659 = vmatpush1.bf16.msra.mxu0 0
  %660 = vmatprep.subr.bf16.mxu0 0
  %661 = vmatpush1.bf16.msra.mxu0 0
  %662 = vmatprep.subr.bf16.mxu0 0
  %663 = vmatpush1.bf16.msra.mxu0 0
  %664 = vmatprep.subr.bf16.mxu0 0
  %665 = vmatpush1.bf16.msra.mxu0 0
  %666 = vmatprep.subr.bf16.mxu0 0
  %667 = vmatpush1.bf16.msra.mxu0 0
  %668 = vmatprep.subr.bf16.mxu0 0
  %669 = vmatpush1.bf16.msra.mxu0 0
  %670 = vmatprep.subr.bf16.mxu0 0
  %671 = vmatpush1.bf16.msra.mxu0 0
  %672 = vmatprep.subr.bf16.mxu0 0
  %673 = vmatpush1.bf16.msra.mxu0 0
  %674 = vmatprep.subr.bf16.mxu0 0
  %675 = vmatpush1.bf16.msra.mxu0 0
  %676 = vmatprep.mubr.bf16.mxu0 0
  %677 = vmatmul.mubr.bf16.gmra.mrb[0].mxu0 %v642
  %v678 = vpop.f32.mrb[0].mxu0
  %v679 = vadd.f32 0.0, %v678
  %v680 = vpop.f32.mrb[0].mxu0
  %v681 = vadd.f32 0.0, %v680
  %v682 = vpop.f32.mrb[0].mxu0
  %v683 = vpop.f32.mrb[0].mxu0
  %684 = vdwg.mxu0
  %v685 = vadd.f32 %v635, %v679
  %v686 = vadd.f32 %v636, %v681
  %v687 = vtanh.pop %v685
  %v688 = vtanh.pop %v686
  %v689 = vmul.f32 %v687, %v36
  %v690 = vmul.f32 %v688, %v37
  %v691 = vadd.f32 %v689, %v38
  %v692 = vadd.f32 %v690, %v39
  %v693 = vmul.f32 %v691, %v632
  %v694 = vmul.f32 %v691, %v692
  %696 = vrot.lane.b32.xlu0 %v694, 64
  %v697 = vpop.permute.xlu0 %696
  %v699 = vadd.f32 %v693, %v697
  %v700 = vtanh.pop %v699
  %v701 = vmul.f32 %v692, %v700
  %v702 = vsel %vm64, %v184, %v150
  %v703 = vsel %vm65, %v186, %v152
  %v704 = vpack.c.bf16 %v701, %v701
  %706 = vrot.lane.b32.xlu0 %v704, 64
  %v707 = vpop.permute.xlu0 %706
  %v709 = vsel %vm238, %v707, 0
  %711 = vmatprep.subr.bf16.mxu0 %v223
  %712 = vmatpush1.bf16.msra.mxu0 %v222
  %713 = vmatprep.subr.bf16.mxu0 %v225
  %714 = vmatpush1.bf16.msra.mxu0 %v224
  %715 = vmatprep.subr.bf16.mxu0 %v227
  %716 = vmatpush1.bf16.msra.mxu0 %v226
  %717 = vmatprep.subr.bf16.mxu0 %v229
  %718 = vmatpush1.bf16.msra.mxu0 %v228
  %719 = vmatprep.subr.bf16.mxu0 0
  %720 = vmatpush1.bf16.msra.mxu0 0
  %721 = vmatprep.subr.bf16.mxu0 0
  %722 = vmatpush1.bf16.msra.mxu0 0
  %723 = vmatprep.subr.bf16.mxu0 0
  %724 = vmatpush1.bf16.msra.mxu0 0
  %725 = vmatprep.subr.bf16.mxu0 0
  %726 = vmatpush1.bf16.msra.mxu0 0
  %727 = vmatprep.subr.bf16.mxu0 0
  %728 = vmatpush1.bf16.msra.mxu0 0
  %729 = vmatprep.subr.bf16.mxu0 0
  %730 = vmatpush1.bf16.msra.mxu0 0
  %731 = vmatprep.subr.bf16.mxu0 0
  %732 = vmatpush1.bf16.msra.mxu0 0
  %733 = vmatprep.subr.bf16.mxu0 0
  %734 = vmatpush1.bf16.msra.mxu0 0
  %735 = vmatprep.subr.bf16.mxu0 0
  %736 = vmatpush1.bf16.msra.mxu0 0
  %737 = vmatprep.subr.bf16.mxu0 0
  %738 = vmatpush1.bf16.msra.mxu0 0
  %739 = vmatprep.subr.bf16.mxu0 0
  %740 = vmatpush1.bf16.msra.mxu0 0
  %741 = vmatprep.subr.bf16.mxu0 0
  %742 = vmatpush1.bf16.msra.mxu0 0
  %743 = vmatprep.mubr.bf16.mxu0 0
  %744 = vmatmul.mubr.bf16.gmra.mrb[0].mxu0 %v709
  %v745 = vpop.f32.mrb[0].mxu0
  %v746 = vadd.f32 0.0, %v745
  %v747 = vpop.f32.mrb[0].mxu0
  %v748 = vadd.f32 0.0, %v747
  %v749 = vpop.f32.mrb[0].mxu0
  %v750 = vpop.f32.mrb[0].mxu0
  %751 = vdwg.mxu0
  %v752 = vadd.f32 %v702, %v746
  %v753 = vadd.f32 %v703, %v748
  %v754 = vtanh.pop %v752
  %v755 = vtanh.pop %v753
  %v756 = vmul.f32 %v754, %v36
  %v757 = vmul.f32 %v755, %v37
  %v758 = vadd.f32 %v756, %v38
  %v759 = vadd.f32 %v757, %v39
  %v760 = vmul.f32 %v758, %v699
  %v761 = vmul.f32 %v758, %v759
  %763 = vrot.lane.b32.xlu0 %v761, 64
  %v764 = vpop.permute.xlu0 %763
  %v766 = vadd.f32 %v760, %v764
  %v767 = vtanh.pop %v766
  %v768 = vmul.f32 %v759, %v767
  %777 = vrot.lane.b32.xlu0 %v299, 64
  %v778 = vpop.permute.xlu0 %777
  %779 = vrot.lane.b32.xlu0 %v366, 64
  %v780 = vpop.permute.xlu0 %779
  %781 = vrot.lane.b32.xlu0 %v433, 64
  %v782 = vpop.permute.xlu0 %781
  %783 = vrot.lane.b32.xlu0 %v500, 64
  %v784 = vpop.permute.xlu0 %783
  %785 = vrot.lane.b32.xlu0 %v567, 64
  %v786 = vpop.permute.xlu0 %785
  %787 = vrot.lane.b32.xlu0 %v634, 64
  %v788 = vpop.permute.xlu0 %787
  %789 = vrot.lane.b32.xlu0 %v701, 64
  %v790 = vpop.permute.xlu0 %789
  %791 = vrot.lane.b32.xlu0 %v768, 64
  %v792 = vpop.permute.xlu0 %791
  %vm801 = vcmask 261120
  %v802 = vsel %vm801, %v778, %v792
  %v803 = vsel %vm801, %v780, %v790
  %v804 = vsel %vm801, %v782, %v788
  %v805 = vsel %vm801, %v784, %v786
  %v806 = vsel %vm801, %v786, %v784
  %v807 = vsel %vm801, %v788, %v782
  %v808 = vsel %vm801, %v790, %v780
  %v809 = vsel %vm801, %v792, %v778
  %v810 = vpack.c.bf16 %v803, %v802
  %v811 = vpack.c.bf16 %v805, %v804
  %v812 = vpack.c.bf16 %v807, %v806
  %v813 = vpack.c.bf16 %v809, %v808
  %v814 = vld [vmem:[%s4] sm:$0xff]
  %v815 = vld [vmem:[%s4 + $0x8] sm:$0xff]
  %v816 = vld [vmem:[%s4 + $0x10] sm:$0xff]
  %v817 = vld [vmem:[%s4 + $0x18] sm:$0xff]
  %v818 = vld [vmem:[%s4 + $0x20] sm:$0xff]
  %v819 = vld [vmem:[%s4 + $0x28] sm:$0xff]
  %v820 = vld [vmem:[%s4 + $0x30] sm:$0xff]
  %v821 = vld [vmem:[%s4 + $0x38] sm:$0xff]
  %v822 = vld [vmem:[%s5] sm:$0x3]
  %v824 = vlaneseq
  %v825 = vshrl.u32 %v824, 7
  %v826 = vsub.s32 0, %v825
  %v827 = vrot.slane %v822, %v826
  %v828 = vlaneseq
  %v829 = vshrl.u32 %v828, 7
  %v830 = vsub.s32 1, %v829
  %v831 = vrot.slane %v822, %v830
  %v842 = vunpack.c.l.b16 %v814
  %v843 = vunpack.c.h.b16 %v814
  %v844 = vunpack.c.l.b16 %v815
  %v845 = vunpack.c.h.b16 %v815
  %v846 = vunpack.c.l.b16 %v816
  %v847 = vunpack.c.h.b16 %v816
  %v848 = vunpack.c.l.b16 %v817
  %v849 = vunpack.c.h.b16 %v817
  %v850 = vunpack.c.l.b16 %v818
  %v851 = vunpack.c.h.b16 %v818
  %v852 = vunpack.c.l.b16 %v819
  %v853 = vunpack.c.h.b16 %v819
  %v854 = vunpack.c.l.b16 %v820
  %v855 = vunpack.c.h.b16 %v820
  %v856 = vunpack.c.l.b16 %v821
  %v857 = vunpack.c.h.b16 %v821
  %v858 = vpack.c.b16 %v844, %v842
  %v859 = vpack.c.b16 %v845, %v843
  %v860 = vpack.c.b16 %v848, %v846
  %v861 = vpack.c.b16 %v849, %v847
  %v862 = vpack.c.b16 %v852, %v850
  %v863 = vpack.c.b16 %v853, %v851
  %v864 = vpack.c.b16 %v856, %v854
  %v865 = vpack.c.b16 %v857, %v855
  %v875 = vsel %vm238, %v810, 0
  %v878 = vsel %vm238, %v811, 0
  %v881 = vsel %vm238, %v812, 0
  %v884 = vsel %vm238, %v813, 0
  %886 = vmatprep.subr.bf16.mxu0 %v859
  %887 = vmatpush1.bf16.msra.mxu0 %v858
  %888 = vmatprep.subr.bf16.mxu0 %v861
  %889 = vmatpush1.bf16.msra.mxu0 %v860
  %890 = vmatprep.subr.bf16.mxu0 %v863
  %891 = vmatpush1.bf16.msra.mxu0 %v862
  %892 = vmatprep.subr.bf16.mxu0 %v865
  %893 = vmatpush1.bf16.msra.mxu0 %v864
  %894 = vmatprep.subr.bf16.mxu0 0
  %895 = vmatpush1.bf16.msra.mxu0 0
  %896 = vmatprep.subr.bf16.mxu0 0
  %897 = vmatpush1.bf16.msra.mxu0 0
  %898 = vmatprep.subr.bf16.mxu0 0
  %899 = vmatpush1.bf16.msra.mxu0 0
  %900 = vmatprep.subr.bf16.mxu0 0
  %901 = vmatpush1.bf16.msra.mxu0 0
  %902 = vmatprep.subr.bf16.mxu0 0
  %903 = vmatpush1.bf16.msra.mxu0 0
  %904 = vmatprep.subr.bf16.mxu0 0
  %905 = vmatpush1.bf16.msra.mxu0 0
  %906 = vmatprep.subr.bf16.mxu0 0
  %907 = vmatpush1.bf16.msra.mxu0 0
  %908 = vmatprep.subr.bf16.mxu0 0
  %909 = vmatpush1.bf16.msra.mxu0 0
  %910 = vmatprep.subr.bf16.mxu0 0
  %911 = vmatpush1.bf16.msra.mxu0 0
  %912 = vmatprep.subr.bf16.mxu0 0
  %913 = vmatpush1.bf16.msra.mxu0 0
  %914 = vmatprep.subr.bf16.mxu0 0
  %915 = vmatpush1.bf16.msra.mxu0 0
  %916 = vmatprep.subr.bf16.mxu0 0
  %917 = vmatpush1.bf16.msra.mxu0 0
  %918 = vmatprep.mubr.bf16.mxu0 0
  %919 = vmatmul.mubr.bf16.gmra.mrb[0].mxu0 %v875
  %v920 = vpop.f32.mrb[0].mxu0
  %v921 = vadd.f32 %v827, %v920
  %v922 = vpop.f32.mrb[0].mxu0
  %v923 = vadd.f32 %v831, %v922
  %v924 = vpop.f32.mrb[0].mxu0
  %v925 = vadd.f32 %v827, %v924
  %v926 = vpop.f32.mrb[0].mxu0
  %v927 = vadd.f32 %v831, %v926
  %928 = vmatprep.mubr.bf16.mxu0 0
  %929 = vmatmul.mubr.bf16.gmra.mrb[0].mxu0 %v878
  %v930 = vpop.f32.mrb[0].mxu0
  %v931 = vadd.f32 %v827, %v930
  %v932 = vpop.f32.mrb[0].mxu0
  %v933 = vadd.f32 %v831, %v932
  %v934 = vpop.f32.mrb[0].mxu0
  %v935 = vadd.f32 %v827, %v934
  %v936 = vpop.f32.mrb[0].mxu0
  %v937 = vadd.f32 %v831, %v936
  %938 = vmatprep.mubr.bf16.mxu0 0
  %939 = vmatmul.mubr.bf16.gmra.mrb[0].mxu0 %v881
  %v940 = vpop.f32.mrb[0].mxu0
  %v941 = vadd.f32 %v827, %v940
  %v942 = vpop.f32.mrb[0].mxu0
  %v943 = vadd.f32 %v831, %v942
  %v944 = vpop.f32.mrb[0].mxu0
  %v945 = vadd.f32 %v827, %v944
  %v946 = vpop.f32.mrb[0].mxu0
  %v947 = vadd.f32 %v831, %v946
  %948 = vmatprep.mubr.bf16.mxu0 0
  %949 = vmatmul.mubr.bf16.gmra.mrb[0].mxu0 %v884
  %v950 = vpop.f32.mrb[0].mxu0
  %v951 = vadd.f32 %v827, %v950
  %v952 = vpop.f32.mrb[0].mxu0
  %v953 = vadd.f32 %v831, %v952
  %v954 = vpop.f32.mrb[0].mxu0
  %v955 = vadd.f32 %v827, %v954
  %v956 = vpop.f32.mrb[0].mxu0
  %v957 = vadd.f32 %v831, %v956
  %958 = vdwg.mxu0
  %v959 = vld [vmem:[%s6] sm:$0xff]
  %v960 = vld [vmem:[%s6 + $0x8] sm:$0xff]
  %v961 = vld [vmem:[%s6 + $0x10] sm:$0xff]
  %v962 = vld [vmem:[%s6 + $0x18] sm:$0xff]
  %v963 = vld [vmem:[%s6 + $0x20] sm:$0xff]
  %v964 = vld [vmem:[%s6 + $0x28] sm:$0xff]
  %v965 = vld [vmem:[%s6 + $0x30] sm:$0xff]
  %v966 = vld [vmem:[%s6 + $0x38] sm:$0xff]
  %v967 = vsel %vm64, %v921, %v955
  %v968 = vsel %vm65, %v923, %v957
  %v977 = vunpack.c.l.b16 %v959
  %v978 = vunpack.c.h.b16 %v959
  %v979 = vunpack.c.l.b16 %v960
  %v980 = vunpack.c.h.b16 %v960
  %v981 = vunpack.c.l.b16 %v961
  %v982 = vunpack.c.h.b16 %v961
  %v983 = vunpack.c.l.b16 %v962
  %v984 = vunpack.c.h.b16 %v962
  %v985 = vunpack.c.l.b16 %v963
  %v986 = vunpack.c.h.b16 %v963
  %v987 = vunpack.c.l.b16 %v964
  %v988 = vunpack.c.h.b16 %v964
  %v989 = vunpack.c.l.b16 %v965
  %v990 = vunpack.c.h.b16 %v965
  %v991 = vunpack.c.l.b16 %v966
  %v992 = vunpack.c.h.b16 %v966
  %v993 = vpack.c.b16 %v979, %v977
  %v994 = vpack.c.b16 %v980, %v978
  %v995 = vpack.c.b16 %v983, %v981
  %v996 = vpack.c.b16 %v984, %v982
  %v997 = vpack.c.b16 %v987, %v985
  %v998 = vpack.c.b16 %v988, %v986
  %v999 = vpack.c.b16 %v991, %v989
  %v1000 = vpack.c.b16 %v992, %v990
  %1009 = vmatprep.subr.bf16.mxu0 %v994
  %1010 = vmatpush1.bf16.msra.mxu0 %v993
  %1011 = vmatprep.subr.bf16.mxu0 %v996
  %1012 = vmatpush1.bf16.msra.mxu0 %v995
  %1013 = vmatprep.subr.bf16.mxu0 %v998
  %1014 = vmatpush1.bf16.msra.mxu0 %v997
  %1015 = vmatprep.subr.bf16.mxu0 %v1000
  %1016 = vmatpush1.bf16.msra.mxu0 %v999
  %1017 = vmatprep.subr.bf16.mxu0 0
  %1018 = vmatpush1.bf16.msra.mxu0 0
  %1019 = vmatprep.subr.bf16.mxu0 0
  %1020 = vmatpush1.bf16.msra.mxu0 0
  %1021 = vmatprep.subr.bf16.mxu0 0
  %1022 = vmatpush1.bf16.msra.mxu0 0
  %1023 = vmatprep.subr.bf16.mxu0 0
  %1024 = vmatpush1.bf16.msra.mxu0 0
  %1025 = vmatprep.subr.bf16.mxu0 0
  %1026 = vmatpush1.bf16.msra.mxu0 0
  %1027 = vmatprep.subr.bf16.mxu0 0
  %1028 = vmatpush1.bf16.msra.mxu0 0
  %1029 = vmatprep.subr.bf16.mxu0 0
  %1030 = vmatpush1.bf16.msra.mxu0 0
  %1031 = vmatprep.subr.bf16.mxu0 0
  %1032 = vmatpush1.bf16.msra.mxu0 0
  %1033 = vmatprep.subr.bf16.mxu0 0
  %1034 = vmatpush1.bf16.msra.mxu0 0
  %1035 = vmatprep.subr.bf16.mxu0 0
  %1036 = vmatpush1.bf16.msra.mxu0 0
  %1037 = vmatprep.subr.bf16.mxu0 0
  %1038 = vmatpush1.bf16.msra.mxu0 0
  %1039 = vmatprep.subr.bf16.mxu0 0
  %1040 = vmatpush1.bf16.msra.mxu0 0
  %1041 = vmatprep.mubr.bf16.mxu0 0
  %1042 = vmatmul.mubr.bf16.gmra.mrb[0].mxu0 %v240
  %v1043 = vpop.f32.mrb[0].mxu0
  %v1044 = vadd.f32 0.0, %v1043
  %v1045 = vpop.f32.mrb[0].mxu0
  %v1046 = vadd.f32 0.0, %v1045
  %v1047 = vpop.f32.mrb[0].mxu0
  %v1048 = vpop.f32.mrb[0].mxu0
  %1049 = vdwg.mxu0
  %v1050 = vadd.f32 %v967, %v1044
  %v1051 = vadd.f32 %v968, %v1046
  %v1052 = vtanh.pop %v1050
  %v1053 = vtanh.pop %v1051
  %v1054 = vmul.f32 %v1052, %v36
  %v1055 = vmul.f32 %v1053, %v37
  %v1056 = vadd.f32 %v1054, %v38
  %v1057 = vadd.f32 %v1055, %v39
  %v1058 = vmul.f32 %v1056, 0.0
  %v1059 = vmul.f32 %v1056, %v1057
  %1061 = vrot.lane.b32.xlu0 %v1059, 64
  %v1062 = vpop.permute.xlu0 %1061
  %v1064 = vadd.f32 %v1058, %v1062
  %v1065 = vtanh.pop %v1064
  %v1066 = vmul.f32 %v1057, %v1065
  %v1067 = vsel %vm64, %v925, %v951
  %v1068 = vsel %vm65, %v927, %v953
  %v1069 = vpack.c.bf16 %v1066, %v1066
  %1071 = vrot.lane.b32.xlu0 %v1069, 64
  %v1072 = vpop.permute.xlu0 %1071
  %v1074 = vsel %vm238, %v1072, 0
  %1076 = vmatprep.subr.bf16.mxu0 %v994
  %1077 = vmatpush1.bf16.msra.mxu0 %v993
  %1078 = vmatprep.subr.bf16.mxu0 %v996
  %1079 = vmatpush1.bf16.msra.mxu0 %v995
  %1080 = vmatprep.subr.bf16.mxu0 %v998
  %1081 = vmatpush1.bf16.msra.mxu0 %v997
  %1082 = vmatprep.subr.bf16.mxu0 %v1000
  %1083 = vmatpush1.bf16.msra.mxu0 %v999
  %1084 = vmatprep.subr.bf16.mxu0 0
  %1085 = vmatpush1.bf16.msra.mxu0 0
  %1086 = vmatprep.subr.bf16.mxu0 0
  %1087 = vmatpush1.bf16.msra.mxu0 0
  %1088 = vmatprep.subr.bf16.mxu0 0
  %1089 = vmatpush1.bf16.msra.mxu0 0
  %1090 = vmatprep.subr.bf16.mxu0 0
  %1091 = vmatpush1.bf16.msra.mxu0 0
  %1092 = vmatprep.subr.bf16.mxu0 0
  %1093 = vmatpush1.bf16.msra.mxu0 0
  %1094 = vmatprep.subr.bf16.mxu0 0
  %1095 = vmatpush1.bf16.msra.mxu0 0
  %1096 = vmatprep.subr.bf16.mxu0 0
  %1097 = vmatpush1.bf16.msra.mxu0 0
  %1098 = vmatprep.subr.bf16.mxu0 0
  %1099 = vmatpush1.bf16.msra.mxu0 0
  %1100 = vmatprep.subr.bf16.mxu0 0
  %1101 = vmatpush1.bf16.msra.mxu0 0
  %1102 = vmatprep.subr.bf16.mxu0 0
  %1103 = vmatpush1.bf16.msra.mxu0 0
  %1104 = vmatprep.subr.bf16.mxu0 0
  %1105 = vmatpush1.bf16.msra.mxu0 0
  %1106 = vmatprep.subr.bf16.mxu0 0
  %1107 = vmatpush1.bf16.msra.mxu0 0
  %1108 = vmatprep.mubr.bf16.mxu0 0
  %1109 = vmatmul.mubr.bf16.gmra.mrb[0].mxu0 %v1074
  %v1110 = vpop.f32.mrb[0].mxu0
  %v1111 = vadd.f32 0.0, %v1110
  %v1112 = vpop.f32.mrb[0].mxu0
  %v1113 = vadd.f32 0.0, %v1112
  %v1114 = vpop.f32.mrb[0].mxu0
  %v1115 = vpop.f32.mrb[0].mxu0
  %1116 = vdwg.mxu0
  %v1117 = vadd.f32 %v1067, %v1111
  %v1118 = vadd.f32 %v1068, %v1113
  %v1119 = vtanh.pop %v1117
  %v1120 = vtanh.pop %v1118
  %v1121 = vmul.f32 %v1119, %v36
  %v1122 = vmul.f32 %v1120, %v37
  %v1123 = vadd.f32 %v1121, %v38
  %v1124 = vadd.f32 %v1122, %v39
  %v1125 = vmul.f32 %v1123, %v1064
  %v1126 = vmul.f32 %v1123, %v1124
  %1128 = vrot.lane.b32.xlu0 %v1126, 64
  %v1129 = vpop.permute.xlu0 %1128
  %v1131 = vadd.f32 %v1125, %v1129
  %v1132 = vtanh.pop %v1131
  %v1133 = vmul.f32 %v1124, %v1132
  %v1134 = vsel %vm64, %v931, %v945
  %v1135 = vsel %vm65, %v933, %v947
  %v1136 = vpack.c.bf16 %v1133, %v1133
  %1138 = vrot.lane.b32.xlu0 %v1136, 64
  %v1139 = vpop.permute.xlu0 %1138
  %v1141 = vsel %vm238, %v1139, 0
  %1143 = vmatprep.subr.bf16.mxu0 %v994
  %1144 = vmatpush1.bf16.msra.mxu0 %v993
  %1145 = vmatprep.subr.bf16.mxu0 %v996
  %1146 = vmatpush1.bf16.msra.mxu0 %v995
  %1147 = vmatprep.subr.bf16.mxu0 %v998
  %1148 = vmatpush1.bf16.msra.mxu0 %v997
  %1149 = vmatprep.subr.bf16.mxu0 %v1000
  %1150 = vmatpush1.bf16.msra.mxu0 %v999
  %1151 = vmatprep.subr.bf16.mxu0 0
  %1152 = vmatpush1.bf16.msra.mxu0 0
  %1153 = vmatprep.subr.bf16.mxu0 0
  %1154 = vmatpush1.bf16.msra.mxu0 0
  %1155 = vmatprep.subr.bf16.mxu0 0
  %1156 = vmatpush1.bf16.msra.mxu0 0
  %1157 = vmatprep.subr.bf16.mxu0 0
  %1158 = vmatpush1.bf16.msra.mxu0 0
  %1159 = vmatprep.subr.bf16.mxu0 0
  %1160 = vmatpush1.bf16.msra.mxu0 0
  %1161 = vmatprep.subr.bf16.mxu0 0
  %1162 = vmatpush1.bf16.msra.mxu0 0
  %1163 = vmatprep.subr.bf16.mxu0 0
  %1164 = vmatpush1.bf16.msra.mxu0 0
  %1165 = vmatprep.subr.bf16.mxu0 0
  %1166 = vmatpush1.bf16.msra.mxu0 0
  %1167 = vmatprep.subr.bf16.mxu0 0
  %1168 = vmatpush1.bf16.msra.mxu0 0
  %1169 = vmatprep.subr.bf16.mxu0 0
  %1170 = vmatpush1.bf16.msra.mxu0 0
  %1171 = vmatprep.subr.bf16.mxu0 0
  %1172 = vmatpush1.bf16.msra.mxu0 0
  %1173 = vmatprep.subr.bf16.mxu0 0
  %1174 = vmatpush1.bf16.msra.mxu0 0
  %1175 = vmatprep.mubr.bf16.mxu0 0
  %1176 = vmatmul.mubr.bf16.gmra.mrb[0].mxu0 %v1141
  %v1177 = vpop.f32.mrb[0].mxu0
  %v1178 = vadd.f32 0.0, %v1177
  %v1179 = vpop.f32.mrb[0].mxu0
  %v1180 = vadd.f32 0.0, %v1179
  %v1181 = vpop.f32.mrb[0].mxu0
  %v1182 = vpop.f32.mrb[0].mxu0
  %1183 = vdwg.mxu0
  %v1184 = vadd.f32 %v1134, %v1178
  %v1185 = vadd.f32 %v1135, %v1180
  %v1186 = vtanh.pop %v1184
  %v1187 = vtanh.pop %v1185
  %v1188 = vmul.f32 %v1186, %v36
  %v1189 = vmul.f32 %v1187, %v37
  %v1190 = vadd.f32 %v1188, %v38
  %v1191 = vadd.f32 %v1189, %v39
  %v1192 = vmul.f32 %v1190, %v1131
  %v1193 = vmul.f32 %v1190, %v1191
  %1195 = vrot.lane.b32.xlu0 %v1193, 64
  %v1196 = vpop.permute.xlu0 %1195
  %v1198 = vadd.f32 %v1192, %v1196
  %v1199 = vtanh.pop %v1198
  %v1200 = vmul.f32 %v1191, %v1199
  %v1201 = vsel %vm64, %v935, %v941
  %v1202 = vsel %vm65, %v937, %v943
  %v1203 = vpack.c.bf16 %v1200, %v1200
  %1205 = vrot.lane.b32.xlu0 %v1203, 64
  %v1206 = vpop.permute.xlu0 %1205
  %v1208 = vsel %vm238, %v1206, 0
  %1210 = vmatprep.subr.bf16.mxu0 %v994
  %1211 = vmatpush1.bf16.msra.mxu0 %v993
  %1212 = vmatprep.subr.bf16.mxu0 %v996
  %1213 = vmatpush1.bf16.msra.mxu0 %v995
  %1214 = vmatprep.subr.bf16.mxu0 %v998
  %1215 = vmatpush1.bf16.msra.mxu0 %v997
  %1216 = vmatprep.subr.bf16.mxu0 %v1000
  %1217 = vmatpush1.bf16.msra.mxu0 %v999
  %1218 = vmatprep.subr.bf16.mxu0 0
  %1219 = vmatpush1.bf16.msra.mxu0 0
  %1220 = vmatprep.subr.bf16.mxu0 0
  %1221 = vmatpush1.bf16.msra.mxu0 0
  %1222 = vmatprep.subr.bf16.mxu0 0
  %1223 = vmatpush1.bf16.msra.mxu0 0
  %1224 = vmatprep.subr.bf16.mxu0 0
  %1225 = vmatpush1.bf16.msra.mxu0 0
  %1226 = vmatprep.subr.bf16.mxu0 0
  %1227 = vmatpush1.bf16.msra.mxu0 0
  %1228 = vmatprep.subr.bf16.mxu0 0
  %1229 = vmatpush1.bf16.msra.mxu0 0
  %1230 = vmatprep.subr.bf16.mxu0 0
  %1231 = vmatpush1.bf16.msra.mxu0 0
  %1232 = vmatprep.subr.bf16.mxu0 0
  %1233 = vmatpush1.bf16.msra.mxu0 0
  %1234 = vmatprep.subr.bf16.mxu0 0
  %1235 = vmatpush1.bf16.msra.mxu0 0
  %1236 = vmatprep.subr.bf16.mxu0 0
  %1237 = vmatpush1.bf16.msra.mxu0 0
  %1238 = vmatprep.subr.bf16.mxu0 0
  %1239 = vmatpush1.bf16.msra.mxu0 0
  %1240 = vmatprep.subr.bf16.mxu0 0
  %1241 = vmatpush1.bf16.msra.mxu0 0
  %1242 = vmatprep.mubr.bf16.mxu0 0
  %1243 = vmatmul.mubr.bf16.gmra.mrb[0].mxu0 %v1208
  %v1244 = vpop.f32.mrb[0].mxu0
  %v1245 = vadd.f32 0.0, %v1244
  %v1246 = vpop.f32.mrb[0].mxu0
  %v1247 = vadd.f32 0.0, %v1246
  %v1248 = vpop.f32.mrb[0].mxu0
  %v1249 = vpop.f32.mrb[0].mxu0
  %1250 = vdwg.mxu0
  %v1251 = vadd.f32 %v1201, %v1245
  %v1252 = vadd.f32 %v1202, %v1247
  %v1253 = vtanh.pop %v1251
  %v1254 = vtanh.pop %v1252
  %v1255 = vmul.f32 %v1253, %v36
  %v1256 = vmul.f32 %v1254, %v37
  %v1257 = vadd.f32 %v1255, %v38
  %v1258 = vadd.f32 %v1256, %v39
  %v1259 = vmul.f32 %v1257, %v1198
  %v1260 = vmul.f32 %v1257, %v1258
  %1262 = vrot.lane.b32.xlu0 %v1260, 64
  %v1263 = vpop.permute.xlu0 %1262
  %v1265 = vadd.f32 %v1259, %v1263
  %v1266 = vtanh.pop %v1265
  %v1267 = vmul.f32 %v1258, %v1266
  %v1268 = vsel %vm64, %v941, %v935
  %v1269 = vsel %vm65, %v943, %v937
  %v1270 = vpack.c.bf16 %v1267, %v1267
  %1272 = vrot.lane.b32.xlu0 %v1270, 64
  %v1273 = vpop.permute.xlu0 %1272
  %v1275 = vsel %vm238, %v1273, 0
  %1277 = vmatprep.subr.bf16.mxu0 %v994
  %1278 = vmatpush1.bf16.msra.mxu0 %v993
  %1279 = vmatprep.subr.bf16.mxu0 %v996
  %1280 = vmatpush1.bf16.msra.mxu0 %v995
  %1281 = vmatprep.subr.bf16.mxu0 %v998
  %1282 = vmatpush1.bf16.msra.mxu0 %v997
  %1283 = vmatprep.subr.bf16.mxu0 %v1000
  %1284 = vmatpush1.bf16.msra.mxu0 %v999
  %1285 = vmatprep.subr.bf16.mxu0 0
  %1286 = vmatpush1.bf16.msra.mxu0 0
  %1287 = vmatprep.subr.bf16.mxu0 0
  %1288 = vmatpush1.bf16.msra.mxu0 0
  %1289 = vmatprep.subr.bf16.mxu0 0
  %1290 = vmatpush1.bf16.msra.mxu0 0
  %1291 = vmatprep.subr.bf16.mxu0 0
  %1292 = vmatpush1.bf16.msra.mxu0 0
  %1293 = vmatprep.subr.bf16.mxu0 0
  %1294 = vmatpush1.bf16.msra.mxu0 0
  %1295 = vmatprep.subr.bf16.mxu0 0
  %1296 = vmatpush1.bf16.msra.mxu0 0
  %1297 = vmatprep.subr.bf16.mxu0 0
  %1298 = vmatpush1.bf16.msra.mxu0 0
  %1299 = vmatprep.subr.bf16.mxu0 0
  %1300 = vmatpush1.bf16.msra.mxu0 0
  %1301 = vmatprep.subr.bf16.mxu0 0
  %1302 = vmatpush1.bf16.msra.mxu0 0
  %1303 = vmatprep.subr.bf16.mxu0 0
  %1304 = vmatpush1.bf16.msra.mxu0 0
  %1305 = vmatprep.subr.bf16.mxu0 0
  %1306 = vmatpush1.bf16.msra.mxu0 0
  %1307 = vmatprep.subr.bf16.mxu0 0
  %1308 = vmatpush1.bf16.msra.mxu0 0
  %1309 = vmatprep.mubr.bf16.mxu0 0
  %1310 = vmatmul.mubr.bf16.gmra.mrb[0].mxu0 %v1275
  %v1311 = vpop.f32.mrb[0].mxu0
  %v1312 = vadd.f32 0.0, %v1311
  %v1313 = vpop.f32.mrb[0].mxu0
  %v1314 = vadd.f32 0.0, %v1313
  %v1315 = vpop.f32.mrb[0].mxu0
  %v1316 = vpop.f32.mrb[0].mxu0
  %1317 = vdwg.mxu0
  %v1318 = vadd.f32 %v1268, %v1312
  %v1319 = vadd.f32 %v1269, %v1314
  %v1320 = vtanh.pop %v1318
  %v1321 = vtanh.pop %v1319
  %v1322 = vmul.f32 %v1320, %v36
  %v1323 = vmul.f32 %v1321, %v37
  %v1324 = vadd.f32 %v1322, %v38
  %v1325 = vadd.f32 %v1323, %v39
  %v1326 = vmul.f32 %v1324, %v1265
  %v1327 = vmul.f32 %v1324, %v1325
  %1329 = vrot.lane.b32.xlu0 %v1327, 64
  %v1330 = vpop.permute.xlu0 %1329
  %v1332 = vadd.f32 %v1326, %v1330
  %v1333 = vtanh.pop %v1332
  %v1334 = vmul.f32 %v1325, %v1333
  %v1335 = vsel %vm64, %v945, %v931
  %v1336 = vsel %vm65, %v947, %v933
  %v1337 = vpack.c.bf16 %v1334, %v1334
  %1339 = vrot.lane.b32.xlu0 %v1337, 64
  %v1340 = vpop.permute.xlu0 %1339
  %v1342 = vsel %vm238, %v1340, 0
  %1344 = vmatprep.subr.bf16.mxu0 %v994
  %1345 = vmatpush1.bf16.msra.mxu0 %v993
  %1346 = vmatprep.subr.bf16.mxu0 %v996
  %1347 = vmatpush1.bf16.msra.mxu0 %v995
  %1348 = vmatprep.subr.bf16.mxu0 %v998
  %1349 = vmatpush1.bf16.msra.mxu0 %v997
  %1350 = vmatprep.subr.bf16.mxu0 %v1000
  %1351 = vmatpush1.bf16.msra.mxu0 %v999
  %1352 = vmatprep.subr.bf16.mxu0 0
  %1353 = vmatpush1.bf16.msra.mxu0 0
  %1354 = vmatprep.subr.bf16.mxu0 0
  %1355 = vmatpush1.bf16.msra.mxu0 0
  %1356 = vmatprep.subr.bf16.mxu0 0
  %1357 = vmatpush1.bf16.msra.mxu0 0
  %1358 = vmatprep.subr.bf16.mxu0 0
  %1359 = vmatpush1.bf16.msra.mxu0 0
  %1360 = vmatprep.subr.bf16.mxu0 0
  %1361 = vmatpush1.bf16.msra.mxu0 0
  %1362 = vmatprep.subr.bf16.mxu0 0
  %1363 = vmatpush1.bf16.msra.mxu0 0
  %1364 = vmatprep.subr.bf16.mxu0 0
  %1365 = vmatpush1.bf16.msra.mxu0 0
  %1366 = vmatprep.subr.bf16.mxu0 0
  %1367 = vmatpush1.bf16.msra.mxu0 0
  %1368 = vmatprep.subr.bf16.mxu0 0
  %1369 = vmatpush1.bf16.msra.mxu0 0
  %1370 = vmatprep.subr.bf16.mxu0 0
  %1371 = vmatpush1.bf16.msra.mxu0 0
  %1372 = vmatprep.subr.bf16.mxu0 0
  %1373 = vmatpush1.bf16.msra.mxu0 0
  %1374 = vmatprep.subr.bf16.mxu0 0
  %1375 = vmatpush1.bf16.msra.mxu0 0
  %1376 = vmatprep.mubr.bf16.mxu0 0
  %1377 = vmatmul.mubr.bf16.gmra.mrb[0].mxu0 %v1342
  %v1378 = vpop.f32.mrb[0].mxu0
  %v1379 = vadd.f32 0.0, %v1378
  %v1380 = vpop.f32.mrb[0].mxu0
  %v1381 = vadd.f32 0.0, %v1380
  %v1382 = vpop.f32.mrb[0].mxu0
  %v1383 = vpop.f32.mrb[0].mxu0
  %1384 = vdwg.mxu0
  %v1385 = vadd.f32 %v1335, %v1379
  %v1386 = vadd.f32 %v1336, %v1381
  %v1387 = vtanh.pop %v1385
  %v1388 = vtanh.pop %v1386
  %v1389 = vmul.f32 %v1387, %v36
  %v1390 = vmul.f32 %v1388, %v37
  %v1391 = vadd.f32 %v1389, %v38
  %v1392 = vadd.f32 %v1390, %v39
  %v1393 = vmul.f32 %v1391, %v1332
  %v1394 = vmul.f32 %v1391, %v1392
  %1396 = vrot.lane.b32.xlu0 %v1394, 64
  %v1397 = vpop.permute.xlu0 %1396
  %v1399 = vadd.f32 %v1393, %v1397
  %v1400 = vtanh.pop %v1399
  %v1401 = vmul.f32 %v1392, %v1400
  %v1402 = vsel %vm64, %v951, %v925
  %v1403 = vsel %vm65, %v953, %v927
  %v1404 = vpack.c.bf16 %v1401, %v1401
  %1406 = vrot.lane.b32.xlu0 %v1404, 64
  %v1407 = vpop.permute.xlu0 %1406
  %v1409 = vsel %vm238, %v1407, 0
  %1411 = vmatprep.subr.bf16.mxu0 %v994
  %1412 = vmatpush1.bf16.msra.mxu0 %v993
  %1413 = vmatprep.subr.bf16.mxu0 %v996
  %1414 = vmatpush1.bf16.msra.mxu0 %v995
  %1415 = vmatprep.subr.bf16.mxu0 %v998
  %1416 = vmatpush1.bf16.msra.mxu0 %v997
  %1417 = vmatprep.subr.bf16.mxu0 %v1000
  %1418 = vmatpush1.bf16.msra.mxu0 %v999
  %1419 = vmatprep.subr.bf16.mxu0 0
  %1420 = vmatpush1.bf16.msra.mxu0 0
  %1421 = vmatprep.subr.bf16.mxu0 0
  %1422 = vmatpush1.bf16.msra.mxu0 0
  %1423 = vmatprep.subr.bf16.mxu0 0
  %1424 = vmatpush1.bf16.msra.mxu0 0
  %1425 = vmatprep.subr.bf16.mxu0 0
  %1426 = vmatpush1.bf16.msra.mxu0 0
  %1427 = vmatprep.subr.bf16.mxu0 0
  %1428 = vmatpush1.bf16.msra.mxu0 0
  %1429 = vmatprep.subr.bf16.mxu0 0
  %1430 = vmatpush1.bf16.msra.mxu0 0
  %1431 = vmatprep.subr.bf16.mxu0 0
  %1432 = vmatpush1.bf16.msra.mxu0 0
  %1433 = vmatprep.subr.bf16.mxu0 0
  %1434 = vmatpush1.bf16.msra.mxu0 0
  %1435 = vmatprep.subr.bf16.mxu0 0
  %1436 = vmatpush1.bf16.msra.mxu0 0
  %1437 = vmatprep.subr.bf16.mxu0 0
  %1438 = vmatpush1.bf16.msra.mxu0 0
  %1439 = vmatprep.subr.bf16.mxu0 0
  %1440 = vmatpush1.bf16.msra.mxu0 0
  %1441 = vmatprep.subr.bf16.mxu0 0
  %1442 = vmatpush1.bf16.msra.mxu0 0
  %1443 = vmatprep.mubr.bf16.mxu0 0
  %1444 = vmatmul.mubr.bf16.gmra.mrb[0].mxu0 %v1409
  %v1445 = vpop.f32.mrb[0].mxu0
  %v1446 = vadd.f32 0.0, %v1445
  %v1447 = vpop.f32.mrb[0].mxu0
  %v1448 = vadd.f32 0.0, %v1447
  %v1449 = vpop.f32.mrb[0].mxu0
  %v1450 = vpop.f32.mrb[0].mxu0
  %1451 = vdwg.mxu0
  %v1452 = vadd.f32 %v1402, %v1446
  %v1453 = vadd.f32 %v1403, %v1448
  %v1454 = vtanh.pop %v1452
  %v1455 = vtanh.pop %v1453
  %v1456 = vmul.f32 %v1454, %v36
  %v1457 = vmul.f32 %v1455, %v37
  %v1458 = vadd.f32 %v1456, %v38
  %v1459 = vadd.f32 %v1457, %v39
  %v1460 = vmul.f32 %v1458, %v1399
  %v1461 = vmul.f32 %v1458, %v1459
  %1463 = vrot.lane.b32.xlu0 %v1461, 64
  %v1464 = vpop.permute.xlu0 %1463
  %v1466 = vadd.f32 %v1460, %v1464
  %v1467 = vtanh.pop %v1466
  %v1468 = vmul.f32 %v1459, %v1467
  %v1469 = vsel %vm64, %v955, %v921
  %v1470 = vsel %vm65, %v957, %v923
  %v1471 = vpack.c.bf16 %v1468, %v1468
  %1473 = vrot.lane.b32.xlu0 %v1471, 64
  %v1474 = vpop.permute.xlu0 %1473
  %v1476 = vsel %vm238, %v1474, 0
  %1478 = vmatprep.subr.bf16.mxu0 %v994
  %1479 = vmatpush1.bf16.msra.mxu0 %v993
  %1480 = vmatprep.subr.bf16.mxu0 %v996
  %1481 = vmatpush1.bf16.msra.mxu0 %v995
  %1482 = vmatprep.subr.bf16.mxu0 %v998
  %1483 = vmatpush1.bf16.msra.mxu0 %v997
  %1484 = vmatprep.subr.bf16.mxu0 %v1000
  %1485 = vmatpush1.bf16.msra.mxu0 %v999
  %1486 = vmatprep.subr.bf16.mxu0 0
  %1487 = vmatpush1.bf16.msra.mxu0 0
  %1488 = vmatprep.subr.bf16.mxu0 0
  %1489 = vmatpush1.bf16.msra.mxu0 0
  %1490 = vmatprep.subr.bf16.mxu0 0
  %1491 = vmatpush1.bf16.msra.mxu0 0
  %1492 = vmatprep.subr.bf16.mxu0 0
  %1493 = vmatpush1.bf16.msra.mxu0 0
  %1494 = vmatprep.subr.bf16.mxu0 0
  %1495 = vmatpush1.bf16.msra.mxu0 0
  %1496 = vmatprep.subr.bf16.mxu0 0
  %1497 = vmatpush1.bf16.msra.mxu0 0
  %1498 = vmatprep.subr.bf16.mxu0 0
  %1499 = vmatpush1.bf16.msra.mxu0 0
  %1500 = vmatprep.subr.bf16.mxu0 0
  %1501 = vmatpush1.bf16.msra.mxu0 0
  %1502 = vmatprep.subr.bf16.mxu0 0
  %1503 = vmatpush1.bf16.msra.mxu0 0
  %1504 = vmatprep.subr.bf16.mxu0 0
  %1505 = vmatpush1.bf16.msra.mxu0 0
  %1506 = vmatprep.subr.bf16.mxu0 0
  %1507 = vmatpush1.bf16.msra.mxu0 0
  %1508 = vmatprep.subr.bf16.mxu0 0
  %1509 = vmatpush1.bf16.msra.mxu0 0
  %1510 = vmatprep.mubr.bf16.mxu0 0
  %1511 = vmatmul.mubr.bf16.gmra.mrb[0].mxu0 %v1476
  %v1512 = vpop.f32.mrb[0].mxu0
  %v1513 = vadd.f32 0.0, %v1512
  %v1514 = vpop.f32.mrb[0].mxu0
  %v1515 = vadd.f32 0.0, %v1514
  %v1516 = vpop.f32.mrb[0].mxu0
  %v1517 = vpop.f32.mrb[0].mxu0
  %1518 = vdwg.mxu0
  %v1519 = vadd.f32 %v1469, %v1513
  %v1520 = vadd.f32 %v1470, %v1515
  %v1521 = vtanh.pop %v1519
  %v1522 = vtanh.pop %v1520
  %v1523 = vmul.f32 %v1521, %v36
  %v1524 = vmul.f32 %v1522, %v37
  %v1525 = vadd.f32 %v1523, %v38
  %v1526 = vadd.f32 %v1524, %v39
  %v1527 = vmul.f32 %v1525, %v1466
  %v1528 = vmul.f32 %v1525, %v1526
  %1530 = vrot.lane.b32.xlu0 %v1528, 64
  %v1531 = vpop.permute.xlu0 %1530
  %v1533 = vadd.f32 %v1527, %v1531
  %v1534 = vtanh.pop %v1533
  %v1535 = vmul.f32 %v1526, %v1534
  %1537 = vrot.lane.b32.xlu0 %v1535, 64
  %v1538 = vpop.permute.xlu0 %1537
  %1540 = vst.msk [vmem:[%s7] sm:$0xff] %vm238, %v1538
  // Predicated region
  $region30: #{_lambda_.1} parent=0 // pred_check
    _
  $region31: #{_lambda_.1} parent=0 // pred_check_branch
    %1542 = sbr.rel (0) target = $region33
  $region32: #{_lambda_.1} parent=0 // pred_region
    _
  $region33: #{_lambda_.1} parent=0 // pred_fallthru
    _
  // Predicated region
  $region34: #{_lambda_.1} parent=0 // pred_check
    _
  $region35: #{_lambda_.1} parent=0 // pred_check_branch
    %1544 = sbr.rel (0) target = $region37
  $region36: #{_lambda_.1} parent=0 // pred_region
    _
  $region37: #{_lambda_.1} parent=0 // pred_fallthru
    _

</llo_original>
